<compile_context>
chip_gen: v6e
topology: v6e:2x2x1
jax: 0.10.0
libtpu: 0.0.40
codegen_flags: <defaults>
</compile_context>

<pallas_src>
import functools

import jax
import jax.numpy as jnp
from jax import lax
from jax.experimental import pallas as pl
from jax.experimental.pallas import tpu as pltpu

# Dilations actually used by the module (padding == dilation for each branch).
DILATIONS = (2, 4, 6)
PAD = max(DILATIONS)            # maximum spatial halo needed

# Static tap grouping by column shift dx.  The dx == 0 group carries the fused
# centre tap (atrous_block1 + the [1,1] taps of all dilated convs) plus the
# dy-only taps; the other six groups hold the three taps of one dilation that
# share a column shift.  The weight stacking in aspp_forward must match.
DYS0 = (0, -2, 2, -4, 4, -6, 6)                        # dx == 0 group
GROUPS = ((-2, (-2, 0, 2)), (2, (-2, 0, 2)),
          (-4, (-4, 0, 4)), (4, (-4, 0, 4)),
          (-6, (-6, 0, 6)), (6, (-6, 0, 6)))           # dx != 0 groups


def _lane_base(W):
    """Start lane of the un-padded image inside the flat (C, ROWS) scratch.

    Needs at least PAD*W + PAD guard lanes on each side (row shift + column
    shift of the flattened H*W axis); rounded up to 128 so the interior copy
    and the zero bands are lane-aligned stores."""
    guard = PAD * W + PAD
    return ((guard + 127) // 128) * 128


def aspp_kernel(x_ref, w0_ref, wg_ref, bias_ref, o_ref, xscr_ref, ps_ref,
                *, H, W, C, D):
    """One batch element per grid step.

    x_ref    : (C, H*W) bf16   image; channels on sublanes, pixels on lanes
    w0_ref   : (D, 7*C) bf16   folded weights of the dx == 0 tap group
    wg_ref   : (6, D, 3*C) bf16 folded weights of the six dx != 0 groups
    bias_ref : (D, 1)   f32    per-batch constant (pooled branch + all biases)
    o_ref    : (D, H*W) f32    lane-dense output block (NCHW flattened)
    xscr_ref : (C, ROWS) bf16  flat zero-padded copy of the image
    ps_ref   : (7*C, H*W) bf16 patch stack (contraction-axis operand)
    """
    HW = H * W
    base = _lane_base(W)
    rows = xscr_ref.shape[1]

    # Zero halo + interior copy, rebuilt every step so the kernel stays
    # correct when the "parallel" batch axis is sharded across TensorCores.
    xscr_ref[:, 0:base] = jnp.zeros((C, base), xscr_ref.dtype)
    xscr_ref[:, base + HW:rows] = jnp.zeros((C, rows - base - HW),
                                            xscr_ref.dtype)
    xscr_ref[:, base:base + HW] = x_ref[...]

    # Column index of every output pixel (W is a power of two -> AND).
    w_idx = lax.broadcasted_iota(jnp.int32, (1, HW), 1) % W

    # dx == 0 group: stack 7 shifted patches along the contraction axis and
    # issue ONE matmul (K = 7*C); no column-wrap mask needed.  The folded
    # per-batch bias is added in the same statement.
    for j, dy in enumerate(DYS0):
        start = base + dy * W
        ps_ref[j * C:(j + 1) * C, :] = xscr_ref[:, start:start + HW]
    o_ref[...] = (jnp.dot(w0_ref[...], ps_ref[...],
                          preferred_element_type=jnp.float32)
                  + bias_ref[...])

    # Six dx != 0 groups: one fused (K = 3*C) matmul + one (D, H*W) mask each,
    # accumulated straight into the output ref.  Masking the (D, H*W) result
    # instead of the (C, H*W) patches is valid because the wrapped lanes hold
    # finite image pixels (assumes no inf/NaN in the input).
    for g, (dx, dys) in enumerate(GROUPS):
        for j, dy in enumerate(dys):
            start = base + dy * W + dx
            ps_ref[j * C:(j + 1) * C, :] = xscr_ref[:, start:start + HW]
        gres = jnp.dot(wg_ref[g], ps_ref[0:len(dys) * C, :],
                       preferred_element_type=jnp.float32)
        keep = (w_idx < (W - dx)) if dx > 0 else (w_idx >= (-dx))
        o_ref[...] += jnp.where(keep, gres, 0.0)


def aspp_forward(x_nchw, params):
    """x_nchw: (N, C_in, H, W) float32 -> (N, depth, H, W) float32."""
    N, C, H, W = x_nchw.shape
    D = params["a1_b"].shape[-1]
    HW = H * W

    # bf16 image for the MXU; metadata reshape only (no transposes).
    x2d = x_nchw.reshape(N, C, HW).astype(jnp.bfloat16)

    # ---- fold conv_1x1_output into every branch (done once, in f32/XLA) ----
    ow = params["out_w"]                                   # (5*D, D)
    ow_img, ow_a1, ow_a6, ow_a12, ow_a18 = (ow[i * D:(i + 1) * D]
                                            for i in range(5))

    # Pooled branch: avg-pool -> 1x1 conv -> bilinear(1x1 -> HxW) == constant.
    # Fold it (and every conv bias) through the output projection into one
    # per-batch (D,) f32 row added inside the kernel.
    mean_c = jnp.mean(x_nchw.astype(jnp.float32), axis=(2, 3))       # (N, C)
    img_feat = mean_c @ params["convp_w"] + params["convp_b"]        # (N, D)
    bias_row = (img_feat @ ow_img
                + params["a1_b"] @ ow_a1 + params["a6_b"] @ ow_a6
                + params["a12_b"] @ ow_a12 + params["a18_b"] @ ow_a18
                + params["out_b"])                                   # (N, D)
    bias_in = bias_row.reshape(N, D, 1).astype(jnp.float32)

    # Per-tap folded weights (conv @ out-projection), computed in f32.
    tapw = {(0, 0): (params["a1_w"] @ ow_a1
                     + params["a6_w"][1, 1] @ ow_a6
                     + params["a12_w"][1, 1] @ ow_a12
                     + params["a18_w"][1, 1] @ ow_a18)}              # (C, D)
    for d, wkey, owb in ((2, "a6_w", ow_a6), (4, "a12_w", ow_a12),
                         (6, "a18_w", ow_a18)):
        wfull = params[wkey]
        for ky in range(3):
            for kx in range(3):
                if ky == 1 and kx == 1:
                    continue
                tapw[((ky - 1) * d, (kx - 1) * d)] = wfull[ky, kx] @ owb

    # Concatenate along the contraction axis per dx group; cast to bf16 last.
    w0 = jnp.concatenate([tapw[(dy, 0)].T for dy in DYS0], axis=1)   # (D, 7C)
    wg = jnp.stack([jnp.concatenate([tapw[(dy, dx)].T for dy in dys], axis=1)
                    for dx, dys in GROUPS], axis=0)                  # (6, D, 3C)
    w0 = w0.astype(jnp.bfloat16)
    wg = wg.astype(jnp.bfloat16)

    base = _lane_base(W)
    rows = 2 * base + HW

    kern = functools.partial(aspp_kernel, H=H, W=W, C=C, D=D)

    out2d = pl.pallas_call(
        kern,
        out_shape=jax.ShapeDtypeStruct((N, D, HW), jnp.float32),
        grid=(N,),
        in_specs=[
            pl.BlockSpec((None, C, HW), lambda n: (n, 0, 0)),      # image (bf16)
            pl.BlockSpec((D, 7 * C), lambda n: (0, 0)),            # dx=0 weights
            pl.BlockSpec((len(GROUPS), D, 3 * C), lambda n: (0, 0, 0)),
            pl.BlockSpec((None, D, 1), lambda n: (n, 0, 0)),       # per-batch bias
        ],
        out_specs=pl.BlockSpec((None, D, HW), lambda n: (n, 0, 0)),
        scratch_shapes=[pltpu.VMEM((C, rows), jnp.bfloat16),       # padded image
                        pltpu.VMEM((7 * C, HW), jnp.bfloat16)],    # patch stack
        compiler_params=pltpu.CompilerParams(
            dimension_semantics=("parallel",),
            vmem_limit_bytes=32 * 1024 * 1024),
    )(x2d, w0, wg, bias_in)

    return out2d.reshape(N, D, H, W)


def aspp_reference(x_nchw, params):
    """Independent pure-JAX (f32) reference mirroring the PyTorch forward."""
    N, C, H, W = x_nchw.shape
    D = params["a1_b"].shape[-1]
    x = jnp.transpose(x_nchw, (0, 2, 3, 1))                        # NHWC

    pooled = jnp.mean(x, axis=(1, 2), keepdims=True)               # (N,1,1,C)
    imgf = jnp.einsum("nhwc,cd->nhwd", pooled, params["convp_w"]) + params["convp_b"]
    imgf = jnp.broadcast_to(imgf, (N, H, W, D))                    # bilinear from 1x1

    a1 = jnp.einsum("nhwc,cd->nhwd", x, params["a1_w"]) + params["a1_b"]

    def dil(w, b, d):
        y = lax.conv_general_dilated(
            x, w, window_strides=(1, 1), padding=[(d, d), (d, d)],
            rhs_dilation=(d, d), dimension_numbers=("NHWC", "HWIO", "NHWC"))
        return y + b

    a6 = dil(params["a6_w"], params["a6_b"], 2)
    a12 = dil(params["a12_w"], params["a12_b"], 4)
    a18 = dil(params["a18_w"], params["a18_b"], 6)

    cat = jnp.concatenate([imgf, a1, a6, a12, a18], axis=-1)
    out = jnp.einsum("nhwc,cd->nhwd", cat, params["out_w"]) + params["out_b"]
    return jnp.transpose(out, (0, 3, 1, 2))


def make_params(key, C, D):
    ks = jax.random.split(key, 12)
    s = 0.05
    return {
        "convp_w": s * jax.random.normal(ks[0], (C, D), jnp.float32),
        "convp_b": s * jax.random.normal(ks[1], (1, D), jnp.float32),
        "a1_w":    s * jax.random.normal(ks[2], (C, D), jnp.float32),
        "a1_b":    s * jax.random.normal(ks[3], (1, D), jnp.float32),
        "a6_w":    s * jax.random.normal(ks[4], (3, 3, C, D), jnp.float32),
        "a6_b":    s * jax.random.normal(ks[5], (1, D), jnp.float32),
        "a12_w":   s * jax.random.normal(ks[6], (3, 3, C, D), jnp.float32),
        "a12_b":   s * jax.random.normal(ks[7], (1, D), jnp.float32),
        "a18_w":   s * jax.random.normal(ks[8], (3, 3, C, D), jnp.float32),
        "a18_b":   s * jax.random.normal(ks[9], (1, D), jnp.float32),
        "out_w":   s * jax.random.normal(ks[10], (5 * D, D), jnp.float32),
        "out_b":   s * jax.random.normal(ks[11], (1, D), jnp.float32),
    }


if __name__ == "__main__":
    # Small synthetic shapes consistent with the module (in_channel -> depth).
    N, C_IN, DEPTH, H, W = 2, 16, 8, 16, 16

    key = jax.random.PRNGKey(0)
    kx, kp = jax.random.split(key)
    x = jax.random.normal(kx, (N, C_IN, H, W), jnp.float32)   # NCHW like PyTorch
    params = make_params(kp, C_IN, DEPTH)

    out = jax.block_until_ready(aspp_forward(x, params))
    ref = jax.block_until_ready(aspp_reference(x, params))

    assert out.shape == (N, DEPTH, H, W), out.shape
    # bf16 MXU operands with f32 accumulation vs. a pure-f32 reference:
    # tolerance loosened accordingly (typical |err| ~1e-3 at these shapes).
    assert jnp.allclose(out, ref, atol=3e-2, rtol=3e-2), \
        float(jnp.max(jnp.abs(out - ref)))
    print("KERNEL_OK")
</pallas_src>

<mosaic_0001>
module attributes {stable_mosaic.version = 11 : i64} {
  func.func @aspp_kernel(%arg0: i32, %arg1: memref<1x16x256xbf16, #tpu.memory_space<vmem>>, %arg2: memref<8x112xbf16, #tpu.memory_space<vmem>>, %arg3: memref<6x8x48xbf16, #tpu.memory_space<vmem>>, %arg4: memref<1x8x1xf32, #tpu.memory_space<vmem>>, %arg5: memref<1x8x256xf32, #tpu.memory_space<vmem>>, %arg6: memref<16x512xbf16, #tpu.memory_space<vmem>>, %arg7: memref<112x256xbf16, #tpu.memory_space<vmem>>) attributes {dimension_semantics = [#tpu.dimension_semantics<parallel>], iteration_bounds = array<i64: 2>, scalar_prefetch = 0 : i64, scratch_operands = 2 : i64, tpu.core_type = #tpu.core_type<tc>, window_params = [{transform_indices = @transform_0, window_bounds = array<i64: 1, 16, 256>}, {pipeline_mode = #tpu.pipeline_mode<synchronous>, transform_indices = @transform_1, window_bounds = array<i64: 8, 112>}, {pipeline_mode = #tpu.pipeline_mode<synchronous>, transform_indices = @transform_2, window_bounds = array<i64: 6, 8, 48>}, {transform_indices = @transform_3, window_bounds = array<i64: 1, 8, 1>}, {transform_indices = @transform_4, window_bounds = array<i64: 1, 8, 256>}]} {
    %cst = arith.constant 0.000000e+00 : bf16
    %0 = vector.broadcast %cst : bf16 to vector<16x128xbf16>
    %c0 = arith.constant 0 : index
    %c0_0 = arith.constant 0 : index
    %1 = vector.load %arg6[%c0, %c0_0] : memref<16x512xbf16, #tpu.memory_space<vmem>>, vector<16x128xbf16>
    tpu.vector_store %arg6[%c0, %c0_0], %0 {strides = array<i32>} : memref<16x512xbf16, #tpu.memory_space<vmem>>, vector<16x128xbf16>,
    %cst_1 = arith.constant 0.000000e+00 : bf16
    %2 = vector.broadcast %cst_1 : bf16 to vector<16x128xbf16>
    %c0_2 = arith.constant 0 : index
    %c384 = arith.constant 384 : index
    %3 = vector.load %arg6[%c0_2, %c384] : memref<16x512xbf16, #tpu.memory_space<vmem>>, vector<16x128xbf16>
    tpu.vector_store %arg6[%c0_2, %c384], %2 {strides = array<i32>} : memref<16x512xbf16, #tpu.memory_space<vmem>>, vector<16x128xbf16>,
    %c0_3 = arith.constant 0 : index
    %c0_4 = arith.constant 0 : index
    %c0_5 = arith.constant 0 : index
    %4 = vector.load %arg1[%c0_3, %c0_4, %c0_5] : memref<1x16x256xbf16, #tpu.memory_space<vmem>>, vector<1x16x256xbf16>
    %5 = vector.shape_cast %4 : vector<1x16x256xbf16> to vector<16x256xbf16>
    %c0_6 = arith.constant 0 : index
    %c128 = arith.constant 128 : index
    %6 = vector.load %arg6[%c0_6, %c128] : memref<16x512xbf16, #tpu.memory_space<vmem>>, vector<16x256xbf16>
    tpu.vector_store %arg6[%c0_6, %c128], %5 {strides = array<i32>} : memref<16x512xbf16, #tpu.memory_space<vmem>>, vector<16x256xbf16>,
    %7 = tpu.iota {dimensions = array<i32: 1>} : vector<1x256xi32>
    %c16_i32 = arith.constant 16 : i32
    %c0_i32 = arith.constant 0 : i32
    %8 = arith.cmpi eq, %c16_i32, %c0_i32 : i32
    %c1_i32 = arith.constant 1 : i32
    %9 = arith.select %8, %c1_i32, %c16_i32 : i32
    %10 = vector.broadcast %9 : i32 to vector<1x256xi32>
    %11 = arith.remsi %7, %10 : vector<1x256xi32>
    %c0_i32_7 = arith.constant 0 : i32
    %12 = vector.broadcast %c0_i32_7 : i32 to vector<1x256xi32>
    %13 = arith.cmpi ne, %11, %12 : vector<1x256xi32>
    %c0_i32_8 = arith.constant 0 : i32
    %14 = vector.broadcast %c0_i32_8 : i32 to vector<1x256xi32>
    %15 = arith.cmpi slt, %11, %14 : vector<1x256xi32>
    %c0_i32_9 = arith.constant 0 : i32
    %16 = arith.cmpi slt, %9, %c0_i32_9 : i32
    %17 = vector.broadcast %16 : i1 to vector<1x256xi1>
    %18 = vector.broadcast %17 : vector<1x256xi1> to vector<1x256xi1>
    %19 = arith.xori %15, %18 : vector<1x256xi1>
    %20 = arith.andi %19, %13 : vector<1x256xi1>
    %21 = vector.broadcast %9 : i32 to vector<1x256xi32>
    %22 = arith.addi %11, %21 : vector<1x256xi32>
    %23 = arith.select %20, %22, %11 : vector<1x256xi1>, vector<1x256xi32>
    %c0_10 = arith.constant 0 : index
    %c128_11 = arith.constant 128 : index
    %24 = vector.load %arg6[%c0_10, %c128_11] : memref<16x512xbf16, #tpu.memory_space<vmem>>, vector<16x256xbf16>
    %c0_12 = arith.constant 0 : index
    %c0_13 = arith.constant 0 : index
    %25 = vector.load %arg7[%c0_12, %c0_13] : memref<112x256xbf16, #tpu.memory_space<vmem>>, vector<16x256xbf16>
    tpu.vector_store %arg7[%c0_12, %c0_13], %24 {strides = array<i32>} : memref<112x256xbf16, #tpu.memory_space<vmem>>, vector<16x256xbf16>,
    %c0_14 = arith.constant 0 : index
    %c96 = arith.constant 96 : index
    %26 = vector.load %arg6[%c0_14, %c96] : memref<16x512xbf16, #tpu.memory_space<vmem>>, vector<16x256xbf16>
    %c16 = arith.constant 16 : index
    %c0_15 = arith.constant 0 : index
    %27 = vector.load %arg7[%c16, %c0_15] : memref<112x256xbf16, #tpu.memory_space<vmem>>, vector<16x256xbf16>
    tpu.vector_store %arg7[%c16, %c0_15], %26 {strides = array<i32>} : memref<112x256xbf16, #tpu.memory_space<vmem>>, vector<16x256xbf16>,
    %c0_16 = arith.constant 0 : index
    %c160 = arith.constant 160 : index
    %28 = vector.load %arg6[%c0_16, %c160] : memref<16x512xbf16, #tpu.memory_space<vmem>>, vector<16x256xbf16>
    %c32 = arith.constant 32 : index
    %c0_17 = arith.constant 0 : index
    %29 = vector.load %arg7[%c32, %c0_17] : memref<112x256xbf16, #tpu.memory_space<vmem>>, vector<16x256xbf16>
    tpu.vector_store %arg7[%c32, %c0_17], %28 {strides = array<i32>} : memref<112x256xbf16, #tpu.memory_space<vmem>>, vector<16x256xbf16>,
    %c0_18 = arith.constant 0 : index
    %c64 = arith.constant 64 : index
    %30 = vector.load %arg6[%c0_18, %c64] : memref<16x512xbf16, #tpu.memory_space<vmem>>, vector<16x256xbf16>
    %c48 = arith.constant 48 : index
    %c0_19 = arith.constant 0 : index
    %31 = vector.load %arg7[%c48, %c0_19] : memref<112x256xbf16, #tpu.memory_space<vmem>>, vector<16x256xbf16>
    tpu.vector_store %arg7[%c48, %c0_19], %30 {strides = array<i32>} : memref<112x256xbf16, #tpu.memory_space<vmem>>, vector<16x256xbf16>,
    %c0_20 = arith.constant 0 : index
    %c192 = arith.constant 192 : index
    %32 = vector.load %arg6[%c0_20, %c192] : memref<16x512xbf16, #tpu.memory_space<vmem>>, vector<16x256xbf16>
    %c64_21 = arith.constant 64 : index
    %c0_22 = arith.constant 0 : index
    %33 = vector.load %arg7[%c64_21, %c0_22] : memref<112x256xbf16, #tpu.memory_space<vmem>>, vector<16x256xbf16>
    tpu.vector_store %arg7[%c64_21, %c0_22], %32 {strides = array<i32>} : memref<112x256xbf16, #tpu.memory_space<vmem>>, vector<16x256xbf16>,
    %c0_23 = arith.constant 0 : index
    %c32_24 = arith.constant 32 : index
    %34 = vector.load %arg6[%c0_23, %c32_24] : memref<16x512xbf16, #tpu.memory_space<vmem>>, vector<16x256xbf16>
    %c80 = arith.constant 80 : index
    %c0_25 = arith.constant 0 : index
    %35 = vector.load %arg7[%c80, %c0_25] : memref<112x256xbf16, #tpu.memory_space<vmem>>, vector<16x256xbf16>
    tpu.vector_store %arg7[%c80, %c0_25], %34 {strides = array<i32>} : memref<112x256xbf16, #tpu.memory_space<vmem>>, vector<16x256xbf16>,
    %c0_26 = arith.constant 0 : index
    %c224 = arith.constant 224 : index
    %36 = vector.load %arg6[%c0_26, %c224] : memref<16x512xbf16, #tpu.memory_space<vmem>>, vector<16x256xbf16>
    %c96_27 = arith.constant 96 : index
    %c0_28 = arith.constant 0 : index
    %37 = vector.load %arg7[%c96_27, %c0_28] : memref<112x256xbf16, #tpu.memory_space<vmem>>, vector<16x256xbf16>
    tpu.vector_store %arg7[%c96_27, %c0_28], %36 {strides = array<i32>} : memref<112x256xbf16, #tpu.memory_space<vmem>>, vector<16x256xbf16>,
    %c0_29 = arith.constant 0 : index
    %c0_30 = arith.constant 0 : index
    %38 = vector.load %arg2[%c0_29, %c0_30] : memref<8x112xbf16, #tpu.memory_space<vmem>>, vector<8x112xbf16>
    %c0_31 = arith.constant 0 : index
    %c0_32 = arith.constant 0 : index
    %39 = vector.load %arg7[%c0_31, %c0_32] : memref<112x256xbf16, #tpu.memory_space<vmem>>, vector<112x256xbf16>
    %cst_33 = arith.constant dense<0.000000e+00> : vector<8x256xf32>
    %40 = tpu.matmul %38, %39, %cst_33 {dimension_numbers = #tpu.dot_dimension_numbers<[1], [0], [0], [1], [0, 0, 1, 1], [], []>} : vector<8x112xbf16>, vector<112x256xbf16>, vector<8x256xf32> -> vector<8x256xf32>
    %c0_34 = arith.constant 0 : index
    %c0_35 = arith.constant 0 : index
    %c0_36 = arith.constant 0 : index
    %41 = vector.load %arg4[%c0_34, %c0_35, %c0_36] : memref<1x8x1xf32, #tpu.memory_space<vmem>>, vector<1x8x1xf32>
    %42 = vector.shape_cast %41 : vector<1x8x1xf32> to vector<8x1xf32>
    %43 = vector.broadcast %42 : vector<8x1xf32> to vector<8x256xf32>
    %44 = arith.addf %40, %43 : vector<8x256xf32>
    %c0_37 = arith.constant 0 : index
    %c0_38 = arith.constant 0 : index
    %c0_39 = arith.constant 0 : index
    %45 = vector.load %arg5[%c0_37, %c0_38, %c0_39] : memref<1x8x256xf32, #tpu.memory_space<vmem>>, vector<1x8x256xf32>
    %46 = vector.shape_cast %45 : vector<1x8x256xf32> to vector<8x256xf32>
    %47 = vector.shape_cast %44 : vector<8x256xf32> to vector<1x8x256xf32>
    tpu.vector_store %arg5[%c0_37, %c0_38, %c0_39], %47 {strides = array<i32>} : memref<1x8x256xf32, #tpu.memory_space<vmem>>, vector<1x8x256xf32>,
    %c0_40 = arith.constant 0 : index
    %c94 = arith.constant 94 : index
    %48 = vector.load %arg6[%c0_40, %c94] : memref<16x512xbf16, #tpu.memory_space<vmem>>, vector<16x256xbf16>
    %c0_41 = arith.constant 0 : index
    %c0_42 = arith.constant 0 : index
    %49 = vector.load %arg7[%c0_41, %c0_42] : memref<112x256xbf16, #tpu.memory_space<vmem>>, vector<16x256xbf16>
    tpu.vector_store %arg7[%c0_41, %c0_42], %48 {strides = array<i32>} : memref<112x256xbf16, #tpu.memory_space<vmem>>, vector<16x256xbf16>,
    %c0_43 = arith.constant 0 : index
    %c126 = arith.constant 126 : index
    %50 = vector.load %arg6[%c0_43, %c126] : memref<16x512xbf16, #tpu.memory_space<vmem>>, vector<16x256xbf16>
    %c16_44 = arith.constant 16 : index
    %c0_45 = arith.constant 0 : index
    %51 = vector.load %arg7[%c16_44, %c0_45] : memref<112x256xbf16, #tpu.memory_space<vmem>>, vector<16x256xbf16>
    tpu.vector_store %arg7[%c16_44, %c0_45], %50 {strides = array<i32>} : memref<112x256xbf16, #tpu.memory_space<vmem>>, vector<16x256xbf16>,
    %c0_46 = arith.constant 0 : index
    %c158 = arith.constant 158 : index
    %52 = vector.load %arg6[%c0_46, %c158] : memref<16x512xbf16, #tpu.memory_space<vmem>>, vector<16x256xbf16>
    %c32_47 = arith.constant 32 : index
    %c0_48 = arith.constant 0 : index
    %53 = vector.load %arg7[%c32_47, %c0_48] : memref<112x256xbf16, #tpu.memory_space<vmem>>, vector<16x256xbf16>
    tpu.vector_store %arg7[%c32_47, %c0_48], %52 {strides = array<i32>} : memref<112x256xbf16, #tpu.memory_space<vmem>>, vector<16x256xbf16>,
    %c0_49 = arith.constant 0 : index
    %c0_50 = arith.constant 0 : index
    %c0_51 = arith.constant 0 : index
    %54 = vector.load %arg3[%c0_49, %c0_50, %c0_51] : memref<6x8x48xbf16, #tpu.memory_space<vmem>>, vector<1x8x48xbf16>
    %55 = vector.shape_cast %54 : vector<1x8x48xbf16> to vector<8x48xbf16>
    %c0_52 = arith.constant 0 : index
    %c0_53 = arith.constant 0 : index
    %56 = vector.load %arg7[%c0_52, %c0_53] : memref<112x256xbf16, #tpu.memory_space<vmem>>, vector<48x256xbf16>
    %cst_54 = arith.constant dense<0.000000e+00> : vector<8x256xf32>
    %57 = tpu.matmul %55, %56, %cst_54 {dimension_numbers = #tpu.dot_dimension_numbers<[1], [0], [0], [1], [0, 0, 1, 1], [], []>} : vector<8x48xbf16>, vector<48x256xbf16>, vector<8x256xf32> -> vector<8x256xf32>
    %c2_i32 = arith.constant 2 : i32
    %58 = vector.broadcast %c2_i32 : i32 to vector<1x256xi32>
    %59 = arith.cmpi sge, %23, %58 : vector<1x256xi32>
    %c0_55 = arith.constant 0 : index
    %c0_56 = arith.constant 0 : index
    %c0_57 = arith.constant 0 : index
    %60 = vector.load %arg5[%c0_55, %c0_56, %c0_57] : memref<1x8x256xf32, #tpu.memory_space<vmem>>, vector<1x8x256xf32>
    %61 = vector.shape_cast %60 : vector<1x8x256xf32> to vector<8x256xf32>
    %cst_58 = arith.constant 0.000000e+00 : f32
    %62 = vector.shape_cast %59 : vector<1x256xi1> to vector<1x256xi1>
    %63 = vector.broadcast %62 : vector<1x256xi1> to vector<8x256xi1>
    %64 = vector.broadcast %cst_58 : f32 to vector<8x256xf32>
    %65 = arith.select %63, %57, %64 : vector<8x256xi1>, vector<8x256xf32>
    %66 = arith.addf %61, %65 : vector<8x256xf32>
    %c0_59 = arith.constant 0 : index
    %c0_60 = arith.constant 0 : index
    %c0_61 = arith.constant 0 : index
    %67 = vector.load %arg5[%c0_59, %c0_60, %c0_61] : memref<1x8x256xf32, #tpu.memory_space<vmem>>, vector<1x8x256xf32>
    %68 = vector.shape_cast %67 : vector<1x8x256xf32> to vector<8x256xf32>
    %69 = vector.shape_cast %66 : vector<8x256xf32> to vector<1x8x256xf32>
    tpu.vector_store %arg5[%c0_59, %c0_60, %c0_61], %69 {strides = array<i32>} : memref<1x8x256xf32, #tpu.memory_space<vmem>>, vector<1x8x256xf32>,
    %c0_62 = arith.constant 0 : index
    %c98 = arith.constant 98 : index
    %70 = vector.load %arg6[%c0_62, %c98] : memref<16x512xbf16, #tpu.memory_space<vmem>>, vector<16x256xbf16>
    %c0_63 = arith.constant 0 : index
    %c0_64 = arith.constant 0 : index
    %71 = vector.load %arg7[%c0_63, %c0_64] : memref<112x256xbf16, #tpu.memory_space<vmem>>, vector<16x256xbf16>
    tpu.vector_store %arg7[%c0_63, %c0_64], %70 {strides = array<i32>} : memref<112x256xbf16, #tpu.memory_space<vmem>>, vector<16x256xbf16>,
    %c0_65 = arith.constant 0 : index
    %c130 = arith.constant 130 : index
    %72 = vector.load %arg6[%c0_65, %c130] : memref<16x512xbf16, #tpu.memory_space<vmem>>, vector<16x256xbf16>
    %c16_66 = arith.constant 16 : index
    %c0_67 = arith.constant 0 : index
    %73 = vector.load %arg7[%c16_66, %c0_67] : memref<112x256xbf16, #tpu.memory_space<vmem>>, vector<16x256xbf16>
    tpu.vector_store %arg7[%c16_66, %c0_67], %72 {strides = array<i32>} : memref<112x256xbf16, #tpu.memory_space<vmem>>, vector<16x256xbf16>,
    %c0_68 = arith.constant 0 : index
    %c162 = arith.constant 162 : index
    %74 = vector.load %arg6[%c0_68, %c162] : memref<16x512xbf16, #tpu.memory_space<vmem>>, vector<16x256xbf16>
    %c32_69 = arith.constant 32 : index
    %c0_70 = arith.constant 0 : index
    %75 = vector.load %arg7[%c32_69, %c0_70] : memref<112x256xbf16, #tpu.memory_space<vmem>>, vector<16x256xbf16>
    tpu.vector_store %arg7[%c32_69, %c0_70], %74 {strides = array<i32>} : memref<112x256xbf16, #tpu.memory_space<vmem>>, vector<16x256xbf16>,
    %c1 = arith.constant 1 : index
    %c0_71 = arith.constant 0 : index
    %c0_72 = arith.constant 0 : index
    %76 = vector.load %arg3[%c1, %c0_71, %c0_72] : memref<6x8x48xbf16, #tpu.memory_space<vmem>>, vector<1x8x48xbf16>
    %77 = vector.shape_cast %76 : vector<1x8x48xbf16> to vector<8x48xbf16>
    %c0_73 = arith.constant 0 : index
    %c0_74 = arith.constant 0 : index
    %78 = vector.load %arg7[%c0_73, %c0_74] : memref<112x256xbf16, #tpu.memory_space<vmem>>, vector<48x256xbf16>
    %cst_75 = arith.constant dense<0.000000e+00> : vector<8x256xf32>
    %79 = tpu.matmul %77, %78, %cst_75 {dimension_numbers = #tpu.dot_dimension_numbers<[1], [0], [0], [1], [0, 0, 1, 1], [], []>} : vector<8x48xbf16>, vector<48x256xbf16>, vector<8x256xf32> -> vector<8x256xf32>
    %c14_i32 = arith.constant 14 : i32
    %80 = vector.broadcast %c14_i32 : i32 to vector<1x256xi32>
    %81 = arith.cmpi slt, %23, %80 : vector<1x256xi32>
    %c0_76 = arith.constant 0 : index
    %c0_77 = arith.constant 0 : index
    %c0_78 = arith.constant 0 : index
    %82 = vector.load %arg5[%c0_76, %c0_77, %c0_78] : memref<1x8x256xf32, #tpu.memory_space<vmem>>, vector<1x8x256xf32>
    %83 = vector.shape_cast %82 : vector<1x8x256xf32> to vector<8x256xf32>
    %cst_79 = arith.constant 0.000000e+00 : f32
    %84 = vector.shape_cast %81 : vector<1x256xi1> to vector<1x256xi1>
    %85 = vector.broadcast %84 : vector<1x256xi1> to vector<8x256xi1>
    %86 = vector.broadcast %cst_79 : f32 to vector<8x256xf32>
    %87 = arith.select %85, %79, %86 : vector<8x256xi1>, vector<8x256xf32>
    %88 = arith.addf %83, %87 : vector<8x256xf32>
    %c0_80 = arith.constant 0 : index
    %c0_81 = arith.constant 0 : index
    %c0_82 = arith.constant 0 : index
    %89 = vector.load %arg5[%c0_80, %c0_81, %c0_82] : memref<1x8x256xf32, #tpu.memory_space<vmem>>, vector<1x8x256xf32>
    %90 = vector.shape_cast %89 : vector<1x8x256xf32> to vector<8x256xf32>
    %91 = vector.shape_cast %88 : vector<8x256xf32> to vector<1x8x256xf32>
    tpu.vector_store %arg5[%c0_80, %c0_81, %c0_82], %91 {strides = array<i32>} : memref<1x8x256xf32, #tpu.memory_space<vmem>>, vector<1x8x256xf32>,
    %c0_83 = arith.constant 0 : index
    %c60 = arith.constant 60 : index
    %92 = vector.load %arg6[%c0_83, %c60] : memref<16x512xbf16, #tpu.memory_space<vmem>>, vector<16x256xbf16>
    %c0_84 = arith.constant 0 : index
    %c0_85 = arith.constant 0 : index
    %93 = vector.load %arg7[%c0_84, %c0_85] : memref<112x256xbf16, #tpu.memory_space<vmem>>, vector<16x256xbf16>
    tpu.vector_store %arg7[%c0_84, %c0_85], %92 {strides = array<i32>} : memref<112x256xbf16, #tpu.memory_space<vmem>>, vector<16x256xbf16>,
    %c0_86 = arith.constant 0 : index
    %c124 = arith.constant 124 : index
    %94 = vector.load %arg6[%c0_86, %c124] : memref<16x512xbf16, #tpu.memory_space<vmem>>, vector<16x256xbf16>
    %c16_87 = arith.constant 16 : index
    %c0_88 = arith.constant 0 : index
    %95 = vector.load %arg7[%c16_87, %c0_88] : memref<112x256xbf16, #tpu.memory_space<vmem>>, vector<16x256xbf16>
    tpu.vector_store %arg7[%c16_87, %c0_88], %94 {strides = array<i32>} : memref<112x256xbf16, #tpu.memory_space<vmem>>, vector<16x256xbf16>,
    %c0_89 = arith.constant 0 : index
    %c188 = arith.constant 188 : index
    %96 = vector.load %arg6[%c0_89, %c188] : memref<16x512xbf16, #tpu.memory_space<vmem>>, vector<16x256xbf16>
    %c32_90 = arith.constant 32 : index
    %c0_91 = arith.constant 0 : index
    %97 = vector.load %arg7[%c32_90, %c0_91] : memref<112x256xbf16, #tpu.memory_space<vmem>>, vector<16x256xbf16>
    tpu.vector_store %arg7[%c32_90, %c0_91], %96 {strides = array<i32>} : memref<112x256xbf16, #tpu.memory_space<vmem>>, vector<16x256xbf16>,
    %c2 = arith.constant 2 : index
    %c0_92 = arith.constant 0 : index
    %c0_93 = arith.constant 0 : index
    %98 = vector.load %arg3[%c2, %c0_92, %c0_93] : memref<6x8x48xbf16, #tpu.memory_space<vmem>>, vector<1x8x48xbf16>
    %99 = vector.shape_cast %98 : vector<1x8x48xbf16> to vector<8x48xbf16>
    %c0_94 = arith.constant 0 : index
    %c0_95 = arith.constant 0 : index
    %100 = vector.load %arg7[%c0_94, %c0_95] : memref<112x256xbf16, #tpu.memory_space<vmem>>, vector<48x256xbf16>
    %cst_96 = arith.constant dense<0.000000e+00> : vector<8x256xf32>
    %101 = tpu.matmul %99, %100, %cst_96 {dimension_numbers = #tpu.dot_dimension_numbers<[1], [0], [0], [1], [0, 0, 1, 1], [], []>} : vector<8x48xbf16>, vector<48x256xbf16>, vector<8x256xf32> -> vector<8x256xf32>
    %c4_i32 = arith.constant 4 : i32
    %102 = vector.broadcast %c4_i32 : i32 to vector<1x256xi32>
    %103 = arith.cmpi sge, %23, %102 : vector<1x256xi32>
    %c0_97 = arith.constant 0 : index
    %c0_98 = arith.constant 0 : index
    %c0_99 = arith.constant 0 : index
    %104 = vector.load %arg5[%c0_97, %c0_98, %c0_99] : memref<1x8x256xf32, #tpu.memory_space<vmem>>, vector<1x8x256xf32>
    %105 = vector.shape_cast %104 : vector<1x8x256xf32> to vector<8x256xf32>
    %cst_100 = arith.constant 0.000000e+00 : f32
    %106 = vector.shape_cast %103 : vector<1x256xi1> to vector<1x256xi1>
    %107 = vector.broadcast %106 : vector<1x256xi1> to vector<8x256xi1>
    %108 = vector.broadcast %cst_100 : f32 to vector<8x256xf32>
    %109 = arith.select %107, %101, %108 : vector<8x256xi1>, vector<8x256xf32>
    %110 = arith.addf %105, %109 : vector<8x256xf32>
    %c0_101 = arith.constant 0 : index
    %c0_102 = arith.constant 0 : index
    %c0_103 = arith.constant 0 : index
    %111 = vector.load %arg5[%c0_101, %c0_102, %c0_103] : memref<1x8x256xf32, #tpu.memory_space<vmem>>, vector<1x8x256xf32>
    %112 = vector.shape_cast %111 : vector<1x8x256xf32> to vector<8x256xf32>
    %113 = vector.shape_cast %110 : vector<8x256xf32> to vector<1x8x256xf32>
    tpu.vector_store %arg5[%c0_101, %c0_102, %c0_103], %113 {strides = array<i32>} : memref<1x8x256xf32, #tpu.memory_space<vmem>>, vector<1x8x256xf32>,
    %c0_104 = arith.constant 0 : index
    %c68 = arith.constant 68 : index
    %114 = vector.load %arg6[%c0_104, %c68] : memref<16x512xbf16, #tpu.memory_space<vmem>>, vector<16x256xbf16>
    %c0_105 = arith.constant 0 : index
    %c0_106 = arith.constant 0 : index
    %115 = vector.load %arg7[%c0_105, %c0_106] : memref<112x256xbf16, #tpu.memory_space<vmem>>, vector<16x256xbf16>
    tpu.vector_store %arg7[%c0_105, %c0_106], %114 {strides = array<i32>} : memref<112x256xbf16, #tpu.memory_space<vmem>>, vector<16x256xbf16>,
    %c0_107 = arith.constant 0 : index
    %c132 = arith.constant 132 : index
    %116 = vector.load %arg6[%c0_107, %c132] : memref<16x512xbf16, #tpu.memory_space<vmem>>, vector<16x256xbf16>
    %c16_108 = arith.constant 16 : index
    %c0_109 = arith.constant 0 : index
    %117 = vector.load %arg7[%c16_108, %c0_109] : memref<112x256xbf16, #tpu.memory_space<vmem>>, vector<16x256xbf16>
    tpu.vector_store %arg7[%c16_108, %c0_109], %116 {strides = array<i32>} : memref<112x256xbf16, #tpu.memory_space<vmem>>, vector<16x256xbf16>,
    %c0_110 = arith.constant 0 : index
    %c196 = arith.constant 196 : index
    %118 = vector.load %arg6[%c0_110, %c196] : memref<16x512xbf16, #tpu.memory_space<vmem>>, vector<16x256xbf16>
    %c32_111 = arith.constant 32 : index
    %c0_112 = arith.constant 0 : index
    %119 = vector.load %arg7[%c32_111, %c0_112] : memref<112x256xbf16, #tpu.memory_space<vmem>>, vector<16x256xbf16>
    tpu.vector_store %arg7[%c32_111, %c0_112], %118 {strides = array<i32>} : memref<112x256xbf16, #tpu.memory_space<vmem>>, vector<16x256xbf16>,
    %c3 = arith.constant 3 : index
    %c0_113 = arith.constant 0 : index
    %c0_114 = arith.constant 0 : index
    %120 = vector.load %arg3[%c3, %c0_113, %c0_114] : memref<6x8x48xbf16, #tpu.memory_space<vmem>>, vector<1x8x48xbf16>
    %121 = vector.shape_cast %120 : vector<1x8x48xbf16> to vector<8x48xbf16>
    %c0_115 = arith.constant 0 : index
    %c0_116 = arith.constant 0 : index
    %122 = vector.load %arg7[%c0_115, %c0_116] : memref<112x256xbf16, #tpu.memory_space<vmem>>, vector<48x256xbf16>
    %cst_117 = arith.constant dense<0.000000e+00> : vector<8x256xf32>
    %123 = tpu.matmul %121, %122, %cst_117 {dimension_numbers = #tpu.dot_dimension_numbers<[1], [0], [0], [1], [0, 0, 1, 1], [], []>} : vector<8x48xbf16>, vector<48x256xbf16>, vector<8x256xf32> -> vector<8x256xf32>
    %c12_i32 = arith.constant 12 : i32
    %124 = vector.broadcast %c12_i32 : i32 to vector<1x256xi32>
    %125 = arith.cmpi slt, %23, %124 : vector<1x256xi32>
    %c0_118 = arith.constant 0 : index
    %c0_119 = arith.constant 0 : index
    %c0_120 = arith.constant 0 : index
    %126 = vector.load %arg5[%c0_118, %c0_119, %c0_120] : memref<1x8x256xf32, #tpu.memory_space<vmem>>, vector<1x8x256xf32>
    %127 = vector.shape_cast %126 : vector<1x8x256xf32> to vector<8x256xf32>
    %cst_121 = arith.constant 0.000000e+00 : f32
    %128 = vector.shape_cast %125 : vector<1x256xi1> to vector<1x256xi1>
    %129 = vector.broadcast %128 : vector<1x256xi1> to vector<8x256xi1>
    %130 = vector.broadcast %cst_121 : f32 to vector<8x256xf32>
    %131 = arith.select %129, %123, %130 : vector<8x256xi1>, vector<8x256xf32>
    %132 = arith.addf %127, %131 : vector<8x256xf32>
    %c0_122 = arith.constant 0 : index
    %c0_123 = arith.constant 0 : index
    %c0_124 = arith.constant 0 : index
    %133 = vector.load %arg5[%c0_122, %c0_123, %c0_124] : memref<1x8x256xf32, #tpu.memory_space<vmem>>, vector<1x8x256xf32>
    %134 = vector.shape_cast %133 : vector<1x8x256xf32> to vector<8x256xf32>
    %135 = vector.shape_cast %132 : vector<8x256xf32> to vector<1x8x256xf32>
    tpu.vector_store %arg5[%c0_122, %c0_123, %c0_124], %135 {strides = array<i32>} : memref<1x8x256xf32, #tpu.memory_space<vmem>>, vector<1x8x256xf32>,
    %c0_125 = arith.constant 0 : index
    %c26 = arith.constant 26 : index
    %136 = vector.load %arg6[%c0_125, %c26] : memref<16x512xbf16, #tpu.memory_space<vmem>>, vector<16x256xbf16>
    %c0_126 = arith.constant 0 : index
    %c0_127 = arith.constant 0 : index
    %137 = vector.load %arg7[%c0_126, %c0_127] : memref<112x256xbf16, #tpu.memory_space<vmem>>, vector<16x256xbf16>
    tpu.vector_store %arg7[%c0_126, %c0_127], %136 {strides = array<i32>} : memref<112x256xbf16, #tpu.memory_space<vmem>>, vector<16x256xbf16>,
    %c0_128 = arith.constant 0 : index
    %c122 = arith.constant 122 : index
    %138 = vector.load %arg6[%c0_128, %c122] : memref<16x512xbf16, #tpu.memory_space<vmem>>, vector<16x256xbf16>
    %c16_129 = arith.constant 16 : index
    %c0_130 = arith.constant 0 : index
    %139 = vector.load %arg7[%c16_129, %c0_130] : memref<112x256xbf16, #tpu.memory_space<vmem>>, vector<16x256xbf16>
    tpu.vector_store %arg7[%c16_129, %c0_130], %138 {strides = array<i32>} : memref<112x256xbf16, #tpu.memory_space<vmem>>, vector<16x256xbf16>,
    %c0_131 = arith.constant 0 : index
    %c218 = arith.constant 218 : index
    %140 = vector.load %arg6[%c0_131, %c218] : memref<16x512xbf16, #tpu.memory_space<vmem>>, vector<16x256xbf16>
    %c32_132 = arith.constant 32 : index
    %c0_133 = arith.constant 0 : index
    %141 = vector.load %arg7[%c32_132, %c0_133] : memref<112x256xbf16, #tpu.memory_space<vmem>>, vector<16x256xbf16>
    tpu.vector_store %arg7[%c32_132, %c0_133], %140 {strides = array<i32>} : memref<112x256xbf16, #tpu.memory_space<vmem>>, vector<16x256xbf16>,
    %c4 = arith.constant 4 : index
    %c0_134 = arith.constant 0 : index
    %c0_135 = arith.constant 0 : index
    %142 = vector.load %arg3[%c4, %c0_134, %c0_135] : memref<6x8x48xbf16, #tpu.memory_space<vmem>>, vector<1x8x48xbf16>
    %143 = vector.shape_cast %142 : vector<1x8x48xbf16> to vector<8x48xbf16>
    %c0_136 = arith.constant 0 : index
    %c0_137 = arith.constant 0 : index
    %144 = vector.load %arg7[%c0_136, %c0_137] : memref<112x256xbf16, #tpu.memory_space<vmem>>, vector<48x256xbf16>
    %cst_138 = arith.constant dense<0.000000e+00> : vector<8x256xf32>
    %145 = tpu.matmul %143, %144, %cst_138 {dimension_numbers = #tpu.dot_dimension_numbers<[1], [0], [0], [1], [0, 0, 1, 1], [], []>} : vector<8x48xbf16>, vector<48x256xbf16>, vector<8x256xf32> -> vector<8x256xf32>
    %c6_i32 = arith.constant 6 : i32
    %146 = vector.broadcast %c6_i32 : i32 to vector<1x256xi32>
    %147 = arith.cmpi sge, %23, %146 : vector<1x256xi32>
    %c0_139 = arith.constant 0 : index
    %c0_140 = arith.constant 0 : index
    %c0_141 = arith.constant 0 : index
    %148 = vector.load %arg5[%c0_139, %c0_140, %c0_141] : memref<1x8x256xf32, #tpu.memory_space<vmem>>, vector<1x8x256xf32>
    %149 = vector.shape_cast %148 : vector<1x8x256xf32> to vector<8x256xf32>
    %cst_142 = arith.constant 0.000000e+00 : f32
    %150 = vector.shape_cast %147 : vector<1x256xi1> to vector<1x256xi1>
    %151 = vector.broadcast %150 : vector<1x256xi1> to vector<8x256xi1>
    %152 = vector.broadcast %cst_142 : f32 to vector<8x256xf32>
    %153 = arith.select %151, %145, %152 : vector<8x256xi1>, vector<8x256xf32>
    %154 = arith.addf %149, %153 : vector<8x256xf32>
    %c0_143 = arith.constant 0 : index
    %c0_144 = arith.constant 0 : index
    %c0_145 = arith.constant 0 : index
    %155 = vector.load %arg5[%c0_143, %c0_144, %c0_145] : memref<1x8x256xf32, #tpu.memory_space<vmem>>, vector<1x8x256xf32>
    %156 = vector.shape_cast %155 : vector<1x8x256xf32> to vector<8x256xf32>
    %157 = vector.shape_cast %154 : vector<8x256xf32> to vector<1x8x256xf32>
    tpu.vector_store %arg5[%c0_143, %c0_144, %c0_145], %157 {strides = array<i32>} : memref<1x8x256xf32, #tpu.memory_space<vmem>>, vector<1x8x256xf32>,
    %c0_146 = arith.constant 0 : index
    %c38 = arith.constant 38 : index
    %158 = vector.load %arg6[%c0_146, %c38] : memref<16x512xbf16, #tpu.memory_space<vmem>>, vector<16x256xbf16>
    %c0_147 = arith.constant 0 : index
    %c0_148 = arith.constant 0 : index
    %159 = vector.load %arg7[%c0_147, %c0_148] : memref<112x256xbf16, #tpu.memory_space<vmem>>, vector<16x256xbf16>
    tpu.vector_store %arg7[%c0_147, %c0_148], %158 {strides = array<i32>} : memref<112x256xbf16, #tpu.memory_space<vmem>>, vector<16x256xbf16>,
    %c0_149 = arith.constant 0 : index
    %c134 = arith.constant 134 : index
    %160 = vector.load %arg6[%c0_149, %c134] : memref<16x512xbf16, #tpu.memory_space<vmem>>, vector<16x256xbf16>
    %c16_150 = arith.constant 16 : index
    %c0_151 = arith.constant 0 : index
    %161 = vector.load %arg7[%c16_150, %c0_151] : memref<112x256xbf16, #tpu.memory_space<vmem>>, vector<16x256xbf16>
    tpu.vector_store %arg7[%c16_150, %c0_151], %160 {strides = array<i32>} : memref<112x256xbf16, #tpu.memory_space<vmem>>, vector<16x256xbf16>,
    %c0_152 = arith.constant 0 : index
    %c230 = arith.constant 230 : index
    %162 = vector.load %arg6[%c0_152, %c230] : memref<16x512xbf16, #tpu.memory_space<vmem>>, vector<16x256xbf16>
    %c32_153 = arith.constant 32 : index
    %c0_154 = arith.constant 0 : index
    %163 = vector.load %arg7[%c32_153, %c0_154] : memref<112x256xbf16, #tpu.memory_space<vmem>>, vector<16x256xbf16>
    tpu.vector_store %arg7[%c32_153, %c0_154], %162 {strides = array<i32>} : memref<112x256xbf16, #tpu.memory_space<vmem>>, vector<16x256xbf16>,
    %c5 = arith.constant 5 : index
    %c0_155 = arith.constant 0 : index
    %c0_156 = arith.constant 0 : index
    %164 = vector.load %arg3[%c5, %c0_155, %c0_156] : memref<6x8x48xbf16, #tpu.memory_space<vmem>>, vector<1x8x48xbf16>
    %165 = vector.shape_cast %164 : vector<1x8x48xbf16> to vector<8x48xbf16>
    %c0_157 = arith.constant 0 : index
    %c0_158 = arith.constant 0 : index
    %166 = vector.load %arg7[%c0_157, %c0_158] : memref<112x256xbf16, #tpu.memory_space<vmem>>, vector<48x256xbf16>
    %cst_159 = arith.constant dense<0.000000e+00> : vector<8x256xf32>
    %167 = tpu.matmul %165, %166, %cst_159 {dimension_numbers = #tpu.dot_dimension_numbers<[1], [0], [0], [1], [0, 0, 1, 1], [], []>} : vector<8x48xbf16>, vector<48x256xbf16>, vector<8x256xf32> -> vector<8x256xf32>
    %c10_i32 = arith.constant 10 : i32
    %168 = vector.broadcast %c10_i32 : i32 to vector<1x256xi32>
    %169 = arith.cmpi slt, %23, %168 : vector<1x256xi32>
    %c0_160 = arith.constant 0 : index
    %c0_161 = arith.constant 0 : index
    %c0_162 = arith.constant 0 : index
    %170 = vector.load %arg5[%c0_160, %c0_161, %c0_162] : memref<1x8x256xf32, #tpu.memory_space<vmem>>, vector<1x8x256xf32>
    %171 = vector.shape_cast %170 : vector<1x8x256xf32> to vector<8x256xf32>
    %cst_163 = arith.constant 0.000000e+00 : f32
    %172 = vector.shape_cast %169 : vector<1x256xi1> to vector<1x256xi1>
    %173 = vector.broadcast %172 : vector<1x256xi1> to vector<8x256xi1>
    %174 = vector.broadcast %cst_163 : f32 to vector<8x256xf32>
    %175 = arith.select %173, %167, %174 : vector<8x256xi1>, vector<8x256xf32>
    %176 = arith.addf %171, %175 : vector<8x256xf32>
    %c0_164 = arith.constant 0 : index
    %c0_165 = arith.constant 0 : index
    %c0_166 = arith.constant 0 : index
    %177 = vector.load %arg5[%c0_164, %c0_165, %c0_166] : memref<1x8x256xf32, #tpu.memory_space<vmem>>, vector<1x8x256xf32>
    %178 = vector.shape_cast %177 : vector<1x8x256xf32> to vector<8x256xf32>
    %179 = vector.shape_cast %176 : vector<8x256xf32> to vector<1x8x256xf32>
    tpu.vector_store %arg5[%c0_164, %c0_165, %c0_166], %179 {strides = array<i32>} : memref<1x8x256xf32, #tpu.memory_space<vmem>>, vector<1x8x256xf32>,
    return
  }
  func.func @transform_0(%arg0: i32) -> (i32, i32, i32) {
    %c0_i32 = arith.constant 0 : i32
    %c0_i32_0 = arith.constant 0 : i32
    %c0_i32_1 = arith.constant 0 : i32
    return %arg0, %c0_i32, %c0_i32_0 : i32, i32, i32
  }
  func.func @transform_1(%arg0: i32) -> (i32, i32) {
    %c0_i32 = arith.constant 0 : i32
    %c0_i32_0 = arith.constant 0 : i32
    %c0_i32_1 = arith.constant 0 : i32
    return %c0_i32, %c0_i32_0 : i32, i32
  }
  func.func @transform_2(%arg0: i32) -> (i32, i32, i32) {
    %c0_i32 = arith.constant 0 : i32
    %c0_i32_0 = arith.constant 0 : i32
    %c0_i32_1 = arith.constant 0 : i32
    %c0_i32_2 = arith.constant 0 : i32
    return %c0_i32, %c0_i32_0, %c0_i32_1 : i32, i32, i32
  }
  func.func @transform_3(%arg0: i32) -> (i32, i32, i32) {
    %c0_i32 = arith.constant 0 : i32
    %c0_i32_0 = arith.constant 0 : i32
    %c0_i32_1 = arith.constant 0 : i32
    return %arg0, %c0_i32, %c0_i32_0 : i32, i32, i32
  }
  func.func @transform_4(%arg0: i32) -> (i32, i32, i32) {
    %c0_i32 = arith.constant 0 : i32
    %c0_i32_0 = arith.constant 0 : i32
    %c0_i32_1 = arith.constant 0 : i32
    return %arg0, %c0_i32, %c0_i32_0 : i32, i32, i32
  }
}

</mosaic_0001>

<llo_original>
// kernel: tpu_custom_call.1
$region0: #{tpu_custom_call.1}
  #allocation0 [shape = 'u32[]', space=smem, size = 0x4, offset = 0x4, fixed_abs, tag = 'smem constant byte address 0x4 - core index']
  #allocation1 [shape = 'u32[144,128]{1,0:T(1,128)}', space=vmem, size = 0x12000, scoped, tag = 'internal scratch']
  #allocation2 [shape = 'bf16[16,512]{1,0:T(8,128)(2,1)}', space=vmem, size = 0x4000, scoped, tag = 'scratch operand']
  #allocation3 [shape = 'bf16[112,256]{1,0:T(8,128)(2,1)}', space=vmem, size = 0xe000, scoped, tag = 'scratch operand']
  %s0 = inlined_call_operand.hbm [shape: bf16[2,16,256], index: 0, kind: input, shape index: {}]
  %s1 = inlined_call_operand.vmem [shape: bf16[8,112], index: 1, kind: input, shape index: {}]
  %s2 = inlined_call_operand.hbm [shape: bf16[6,8,48], index: 2, kind: input, shape index: {}]
  %s3 = inlined_call_operand.vmem [shape: f32[2,8,1], index: 3, kind: input, shape index: {}]
  %s4 = inlined_call_operand.hbm [shape: f32[2,8,256], index: 4, kind: output, shape index: {}]
  %s5 = sld [smem:[#allocation0]]
  $region57: #{tpu_custom_call.1} parent=0
    _
  %s7 = ssub.s32 1, %s5
  %s8 = scalar_select 0, %s7, %s5
  $region1: #{tpu_custom_call.1} parent=0
    #allocation4 [shape = 'u8[16384]{0}', space=vmem, size = 0x4000, scoped, tag = 'input window, operand 0']
    #allocation5 [shape = 's32[2]{0}', space=sflag, size = 0x8, scoped, tag = 'scoped memory for tpu_custom_call.1']
    #allocation6 [shape = 's32[2]{0}', space=sflag, size = 0x8, scoped, tag = 'scoped memory for tpu_custom_call.1']
    #allocation7 [shape = 'u8[12288]{0}', space=vmem, size = 0x3000, scoped, tag = 'input window, operand 2, single buffered']
    #allocation8 [shape = 's32[1]{0}', space=sflag, size = 0x4, scoped, tag = 'scoped memory for tpu_custom_call.1']
    #allocation9 [shape = 'u8[16384]{0}', space=vmem, size = 0x4000, scoped, tag = 'output window, operand 0']
    %9 = vsyncpa [#allocation5], 0
    %s10 = scalar_lea.sflag [#allocation5], 1
    %11 = vsyncpa %s10, 0
    %12 = vsyncpa [#allocation8], 0
    %13 = vsyncpa [#allocation6], 0
    %s14 = scalar_lea.sflag [#allocation6], 1
    %15 = vsyncpa %s14, 0
    loop: start=0, step=1, limit=4
    $region2: #{tpu_custom_call.1} parent=1 // loop_pre_header
      _
    $region3: #{tpu_custom_call.1} parent=1 // loop_header
      %s17 = sphi 0, %s21
      %p18 = scmp.ge.s32.totalorder %s17, 4
      %s27 = sphi 0, %s29
      %s30 = sphi 0, %s27
      %s31 = sphi 0, %s30
      %s47 = sphi 0, %s31
      %s51 = sphi 0, %s51
      %s53 = sphi 0, %s51
      %s54 = sphi 0, %s53
      %s68 = sphi 0, %s54
      %s72 = sphi 0, %s72
      %s74 = sphi 0, %s72
      %s75 = sphi 0, %s74
      %s89 = sphi 0, %s75
      %s95 = sphi 0, %s97
      %s98 = sphi 0, %s95
      %s99 = sphi 0, %s98
      %s115 = sphi 0, %s99
      %s121 = sphi 0, %s123
      %s124 = sphi 0, %s121
      %s125 = sphi 0, %s124
      %s141 = sphi 0, %s125
    $region4: #{tpu_custom_call.1} parent=1 // loop_header_branch
      %20 = sbr.rel (%p18) target = $region8
    $region5: #{tpu_custom_call.1} parent=1 // loop_body
      %s22 = ssub.s32 %s17, 1
      %s23 = ssub.s32 %s17, 2
      %s24 = sadd.s32 %s17, 1
      %s25 = ssub.s32 %s17, %s24
      %p26 = scmp.eq.s32.totalorder %s25, 0
      %s28 = sadd.s32 %s27, 1
      %s29 = scalar_select %p26, %s27, %s28
      %p32 = pneg %p26
      %p33 = scmp.eq.s32.totalorder %s17, 1
      %p34 = por %p32, %p33
      %p35 = scmp.ne.s32.totalorder %s27, %s30
      %p36 = scmp.eq.s32.totalorder %s17, 0
      %p37 = por %p35, %p36
      %p38 = scmp.ne.s32.totalorder %s27, %s30
      %p39 = scmp.eq.s32.totalorder %s22, 1
      %p40 = por %p38, %p39
      %p41 = scmp.ne.s32.totalorder %s30, %s31
      %p42 = scmp.eq.s32.totalorder %s22, 0
      %p43 = por %p41, %p42
      %p44 = scmp.ne.s32.totalorder %s30, %s31
      %p45 = scmp.eq.s32.totalorder %s23, 1
      %p46 = por %p44, %p45
      %p48 = scmp.ne.s32.totalorder %s31, %s47
      %p49 = scmp.eq.s32.totalorder %s23, 0
      %p50 = por %p48, %p49
      %s52 = sadd.s32 %s51, 1
      %p55 = scmp.eq.s32.totalorder %s17, 1
      %p56 = scmp.ne.s32.totalorder %s51, %s53
      %p57 = scmp.eq.s32.totalorder %s17, 0
      %p58 = por %p56, %p57
      %p59 = scmp.ne.s32.totalorder %s51, %s53
      %p60 = scmp.eq.s32.totalorder %s22, 1
      %p61 = por %p59, %p60
      %p62 = scmp.ne.s32.totalorder %s53, %s54
      %p63 = scmp.eq.s32.totalorder %s22, 0
      %p64 = por %p62, %p63
      %p65 = scmp.ne.s32.totalorder %s53, %s54
      %p66 = scmp.eq.s32.totalorder %s23, 1
      %p67 = por %p65, %p66
      %p69 = scmp.ne.s32.totalorder %s54, %s68
      %p70 = scmp.eq.s32.totalorder %s23, 0
      %p71 = por %p69, %p70
      %s73 = sadd.s32 %s72, 1
      %p76 = scmp.eq.s32.totalorder %s17, 1
      %p77 = scmp.ne.s32.totalorder %s72, %s74
      %p78 = scmp.eq.s32.totalorder %s17, 0
      %p79 = por %p77, %p78
      %p80 = scmp.ne.s32.totalorder %s72, %s74
      %p81 = scmp.eq.s32.totalorder %s22, 1
      %p82 = por %p80, %p81
      %p83 = scmp.ne.s32.totalorder %s74, %s75
      %p84 = scmp.eq.s32.totalorder %s22, 0
      %p85 = por %p83, %p84
      %p86 = scmp.ne.s32.totalorder %s74, %s75
      %p87 = scmp.eq.s32.totalorder %s23, 1
      %p88 = por %p86, %p87
      %p90 = scmp.ne.s32.totalorder %s75, %s89
      %p91 = scmp.eq.s32.totalorder %s23, 0
      %p92 = por %p90, %p91
      %s93 = ssub.s32 %s17, %s24
      %p94 = scmp.eq.s32.totalorder %s93, 0
      %s96 = sadd.s32 %s95, 1
      %s97 = scalar_select %p94, %s95, %s96
      %p100 = pneg %p94
      %p101 = scmp.eq.s32.totalorder %s17, 1
      %p102 = por %p100, %p101
      %p103 = scmp.ne.s32.totalorder %s95, %s98
      %p104 = scmp.eq.s32.totalorder %s17, 0
      %p105 = por %p103, %p104
      %p106 = scmp.ne.s32.totalorder %s95, %s98
      %p107 = scmp.eq.s32.totalorder %s22, 1
      %p108 = por %p106, %p107
      %p109 = scmp.ne.s32.totalorder %s98, %s99
      %p110 = scmp.eq.s32.totalorder %s22, 0
      %p111 = por %p109, %p110
      %p112 = scmp.ne.s32.totalorder %s98, %s99
      %p113 = scmp.eq.s32.totalorder %s23, 1
      %p114 = por %p112, %p113
      %p116 = scmp.ne.s32.totalorder %s99, %s115
      %p117 = scmp.eq.s32.totalorder %s23, 0
      %p118 = por %p116, %p117
      %s119 = ssub.s32 %s17, %s24
      %p120 = scmp.eq.s32.totalorder %s119, 0
      %s122 = sadd.s32 %s121, 1
      %s123 = scalar_select %p120, %s121, %s122
      %p126 = pneg %p120
      %p127 = scmp.eq.s32.totalorder %s17, 1
      %p128 = por %p126, %p127
      %p129 = scmp.ne.s32.totalorder %s121, %s124
      %p130 = scmp.eq.s32.totalorder %s17, 0
      %p131 = por %p129, %p130
      %p132 = scmp.ne.s32.totalorder %s121, %s124
      %p133 = scmp.eq.s32.totalorder %s22, 1
      %p134 = por %p132, %p133
      %p135 = scmp.ne.s32.totalorder %s124, %s125
      %p136 = scmp.eq.s32.totalorder %s22, 0
      %p137 = por %p135, %p136
      %p138 = scmp.ne.s32.totalorder %s124, %s125
      %p139 = scmp.eq.s32.totalorder %s23, 1
      %p140 = por %p138, %p139
      %p142 = scmp.ne.s32.totalorder %s125, %s141
      %p143 = scmp.eq.s32.totalorder %s23, 0
      %p144 = por %p142, %p143
      %p145 = scmp.le.s32.totalorder 1, %s17
      %p146 = scmp.lt.s32.totalorder %s17, 3
      %p147 = pnand %p145, %p146
      %p148 = pneg %p147
      // Predicated region
      $region9: #{tpu_custom_call.1} parent=5 // pred_check
        _
      $region10: #{tpu_custom_call.1} parent=5 // pred_check_branch
        %150 = sbr.rel (%p147) target = $region12
      $region11: #{tpu_custom_call.1} parent=5 // pred_region
        %s151 = ssub.s32 %s17, 1
        // Predicated region
        $region13: #{tpu_custom_call.1} parent=11 // pred_check
          %p152 = pneg %p64
        $region14: #{tpu_custom_call.1} parent=11 // pred_check_branch
          %154 = sbr.rel (%p152) target = $region16
        $region15: #{tpu_custom_call.1} parent=11 // pred_region
          _
        $region16: #{tpu_custom_call.1} parent=11 // pred_fallthru
          _
        // Predicated region
        $region17: #{tpu_custom_call.1} parent=11 // pred_check
          %p155 = pneg %p85
        $region18: #{tpu_custom_call.1} parent=11 // pred_check_branch
          %157 = sbr.rel (%p155) target = $region20
        $region19: #{tpu_custom_call.1} parent=11 // pred_region
          %s159 = ssub.s32 384, 384
          %160 = vsyncadd [#allocation8], %s159
          %s161 = sshll.u32 [#allocation7], 4
          %s162 = int_to_ptr.vmem [resolvable:$true] %s161
          %167 = dma.hbm_to_vmem [thread:$0]  %s2, 384, %s162, [#allocation8], 64, 64, 4
        $region20: #{tpu_custom_call.1} parent=11 // pred_fallthru
          _
      $region12: #{tpu_custom_call.1} parent=5 // pred_fallthru
        _
      %p168 = scmp.lt.s32.totalorder %s17, 2
      // Predicated region
      $region21: #{tpu_custom_call.1} parent=5 // pred_check
        %p169 = pneg %p168
      $region22: #{tpu_custom_call.1} parent=5 // pred_check_branch
        %171 = sbr.rel (%p169) target = $region24
      $region23: #{tpu_custom_call.1} parent=5 // pred_region
        // Predicated region
        $region25: #{tpu_custom_call.1} parent=23 // pred_check
          %p172 = pneg %p37
        $region26: #{tpu_custom_call.1} parent=23 // pred_check_branch
          %174 = sbr.rel (%p172) target = $region28
        $region27: #{tpu_custom_call.1} parent=23 // pred_region
          %s175 = sand.u32 %s27, 1
          %s176 = scalar_lea.sflag [#allocation5], %s175
          %s177 = sand.u32 %s27, 1
          %s178 = smul.addr %s177, 16
          %s179 = scalar_lea.vmem [#allocation4], %s178
          %s181 = ssub.s32 256, 256
          %182 = vsyncadd %s176, %s181
          %s183 = smul.addr %s17, 4
          %s184 = smul.addr %s183, 64
          %s185 = scalar_lea.hbm %s0, %s184
          %s186 = sshll.u32 %s179, 4
          %s187 = int_to_ptr.vmem [resolvable:$true] %s186
          %192 = dma.hbm_to_vmem [thread:$0]  %s185, 256, %s187, %s176, 128, 128, 8
        $region28: #{tpu_custom_call.1} parent=23 // pred_fallthru
          _
        // Predicated region
        $region29: #{tpu_custom_call.1} parent=23 // pred_check
          %p193 = pneg %p105
        $region30: #{tpu_custom_call.1} parent=23 // pred_check_branch
          %195 = sbr.rel (%p193) target = $region32
        $region31: #{tpu_custom_call.1} parent=23 // pred_region
          %p196 = scmp.lt.s32.totalorder %s17, 1
          %s197 = scalar_select %p196, %s17, 1
          %s198 = smul.addr %s197, 8
          %s199 = scalar_lea.vmem %s3, %s198
        $region32: #{tpu_custom_call.1} parent=23 // pred_fallthru
          _
      $region24: #{tpu_custom_call.1} parent=5 // pred_fallthru
        _
      %p200 = scmp.le.s32.totalorder 1, %s17
      %p201 = scmp.lt.s32.totalorder %s17, 3
      %p202 = pnand %p200, %p201
      %p203 = pneg %p202
      // Predicated region
      $region33: #{tpu_custom_call.1} parent=5 // pred_check
        _
      $region34: #{tpu_custom_call.1} parent=5 // pred_check_branch
        %205 = sbr.rel (%p202) target = $region36
      $region35: #{tpu_custom_call.1} parent=5 // pred_region
        %s206 = ssub.s32 %s17, 1
        %s207 = sand.u32 %s30, 1
        %s208 = scalar_lea.sflag [#allocation5], %s207
        %s209 = sand.u32 %s30, 1
        %s210 = smul.addr %s209, 16
        %s211 = scalar_lea.vmem [#allocation4], %s210
        // Predicated region
        $region37: #{tpu_custom_call.1} parent=35 // pred_check
          %p212 = pneg %p43
        $region38: #{tpu_custom_call.1} parent=35 // pred_check_branch
          %214 = sbr.rel (%p212) target = $region40
        $region39: #{tpu_custom_call.1} parent=35 // pred_region
          %215 = dma.done %s208, 256
        $region40: #{tpu_custom_call.1} parent=35 // pred_fallthru
          _
        // Predicated region
        $region41: #{tpu_custom_call.1} parent=35 // pred_check
          %p216 = pneg %p85
        $region42: #{tpu_custom_call.1} parent=35 // pred_check_branch
          %218 = sbr.rel (%p216) target = $region44
        $region43: #{tpu_custom_call.1} parent=35 // pred_region
          %219 = dma.done [#allocation8], 384
        $region44: #{tpu_custom_call.1} parent=35 // pred_fallthru
          _
        %s220 = sand.u32 %s30, 1
        %s221 = scalar_lea.sflag [#allocation5], %s220
        %s222 = sand.u32 %s30, 1
        %s223 = smul.addr %s222, 16
        %s224 = scalar_lea.vmem [#allocation4], %s223
        %p225 = pneg %p43
        %p226 = pneg %p40
        %p227 = pneg %p64
        %p228 = pneg %p61
        %p229 = pneg %p85
        %p230 = pneg %p82
        %p231 = scmp.lt.s32.totalorder %s22, 1
        %s232 = scalar_select %p231, %s22, 1
        %s233 = smul.addr %s232, 8
        %s234 = scalar_lea.vmem %s3, %s233
        %p235 = pneg %p111
        %p236 = pneg %p108
        %p237 = pneg %p137
        %p238 = pneg %p134
        %s239 = sand.u32 %s124, 1
        %s240 = scalar_lea.sflag [#allocation6], %s239
        %s241 = sand.u32 %s124, 1
        %s242 = smul.addr %s241, 16
        %s243 = scalar_lea.vmem [#allocation9], %s242
        %p244 = scmp.lt.s32.totalorder %s22, 1
        %s245 = scalar_select %p244, %s22, 1
        %s246 = smul.addr %s245, 8
        %s247 = scalar_lea.vmem %s3, %s246
        %249 = vst [vmem:[#allocation2] sm:$0xf] 0
        %250 = vst [vmem:[#allocation2 + $0x10] sm:$0xf] 0
        %251 = vst [vmem:[#allocation2 + $0xc] sm:$0xf] 0
        %252 = vst [vmem:[#allocation2 + $0x1c] sm:$0xf] 0
        %v253 = vld [vmem:[%s211] sm:$0xff]
        %v254 = vld [vmem:[%s211 + $0x8] sm:$0xff]
        %255 = vst [vmem:[#allocation2 + $0x4] sm:$0xff] %v253
        %256 = vst [vmem:[#allocation2 + $0x14] sm:$0xff] %v254
        %v257 = vlaneseq
        %v258 = vand.u32 %v257, 127
        %v259 = vadd.s32 %v258, 128
        %vm260 = vcmp.lt.s32.totalorder %v258, 0
        %v261 = vsub.s32 0, %v258
        %v262 = vsel %vm260, %v261, %v258
        %v263 = vshrl.u32 %v262, 4
        %v264 = vand.u32 %v262, 15
        %v265 = vsub.s32 0, %v264
        %v266 = vsel %vm260, %v265, %v264
        %vm267 = vcmp.lt.s32.totalorder %v259, 0
        %v268 = vsub.s32 0, %v259
        %v269 = vsel %vm267, %v268, %v259
        %v270 = vshrl.u32 %v269, 4
        %v271 = vand.u32 %v269, 15
        %v272 = vsub.s32 0, %v271
        %v273 = vsel %vm267, %v272, %v271
        %vm274 = vcmp.ne.s32.totalorder %v266, 0
        %vm275 = vcmp.ne.s32.totalorder %v273, 0
        %vm276 = vcmp.lt.s32.totalorder %v266, 0
        %vm277 = vcmp.lt.s32.totalorder %v273, 0
        %vm278 = vmand %vm276, %vm274
        %vm279 = vmand %vm277, %vm275
        %v280 = vadd.s32 %v266, 16
        %v281 = vadd.s32 %v273, 16
        %v282 = vsel %vm278, %v280, %v266
        %v283 = vsel %vm279, %v281, %v273
        %v284 = vld [vmem:[#allocation2 + $0x4] sm:$0xff]
        %v285 = vld [vmem:[#allocation2 + $0x14] sm:$0xff]
        %286 = vst [vmem:[#allocation3] sm:$0xff] %v284
        %287 = vst [vmem:[#allocation3 + $0x8] sm:$0xff] %v285
        %v288 = vld [vmem:[#allocation2] sm:$0xff]
        %v289 = vld [vmem:[#allocation2 + $0x8] sm:$0xf]
        %v290 = vld [vmem:[#allocation2 + $0x10] sm:$0xff]
        %v291 = vld [vmem:[#allocation2 + $0x18] sm:$0xf]
        %296 = vrot.lane.b32.xlu0 %v288, 32
        %v297 = vpop.permute.xlu0 %296
        %298 = vrot.lane.b32.xlu0 %v289, 32
        %v299 = vpop.permute.xlu0 %298
        %300 = vrot.lane.b32.xlu0 %v290, 32
        %v301 = vpop.permute.xlu0 %300
        %302 = vrot.lane.b32.xlu0 %v291, 32
        %v303 = vpop.permute.xlu0 %302
        %v304 = vrot.slane %v297, 4
        %v305 = vrot.slane %v299, 4
        %v306 = vrot.slane %v301, 4
        %v307 = vrot.slane %v303, 4
        %vm308 = vcmask 1043456
        %v309 = vsel %vm308, %v304, %v305
        %vm310 = vcmask 261120
        %v311 = vsel %vm310, %v297, %v309
        %v312 = vsel %vm308, %v306, %v307
        %v313 = vsel %vm310, %v301, %v312
        %316 = vst [vmem:[#allocation3 + $0x10] sm:$0xff] %v311
        %317 = vst [vmem:[#allocation3 + $0x18] sm:$0xff] %v313
        %v318 = vld [vmem:[#allocation2 + $0x4] sm:$0xff]
        %v319 = vld [vmem:[#allocation2 + $0xc] sm:$0xf]
        %v320 = vld [vmem:[#allocation2 + $0x14] sm:$0xff]
        %v321 = vld [vmem:[#allocation2 + $0x1c] sm:$0xf]
        %326 = vrot.lane.b32.xlu0 %v318, 96
        %v327 = vpop.permute.xlu0 %326
        %328 = vrot.lane.b32.xlu0 %v319, 96
        %v329 = vpop.permute.xlu0 %328
        %330 = vrot.lane.b32.xlu0 %v320, 96
        %v331 = vpop.permute.xlu0 %330
        %332 = vrot.lane.b32.xlu0 %v321, 96
        %v333 = vpop.permute.xlu0 %332
        %v334 = vrot.slane %v327, 4
        %v335 = vrot.slane %v329, 4
        %v336 = vrot.slane %v331, 4
        %v337 = vrot.slane %v333, 4
        %v338 = vsel %vm308, %v334, %v335
        %vm339 = vcmask 785408
        %v340 = vsel %vm339, %v327, %v338
        %v341 = vsel %vm308, %v336, %v337
        %v342 = vsel %vm339, %v331, %v341
        %345 = vst [vmem:[#allocation3 + $0x20] sm:$0xff] %v340
        %346 = vst [vmem:[#allocation3 + $0x28] sm:$0xff] %v342
        %v347 = vld [vmem:[#allocation2] sm:$0xff]
        %v348 = vld [vmem:[#allocation2 + $0x8] sm:$0xf]
        %v349 = vld [vmem:[#allocation2 + $0x10] sm:$0xff]
        %v350 = vld [vmem:[#allocation2 + $0x18] sm:$0xf]
        %355 = vrot.lane.b32.xlu0 %v347, 64
        %v356 = vpop.permute.xlu0 %355
        %357 = vrot.lane.b32.xlu0 %v348, 64
        %v358 = vpop.permute.xlu0 %357
        %359 = vrot.lane.b32.xlu0 %v349, 64
        %v360 = vpop.permute.xlu0 %359
        %361 = vrot.lane.b32.xlu0 %v350, 64
        %v362 = vpop.permute.xlu0 %361
        %v363 = vrot.slane %v356, 4
        %v364 = vrot.slane %v358, 4
        %v365 = vrot.slane %v360, 4
        %v366 = vrot.slane %v362, 4
        %v367 = vsel %vm308, %v363, %v364
        %vm368 = vcmask 523264
        %v369 = vsel %vm368, %v356, %v367
        %v370 = vsel %vm308, %v365, %v366
        %v371 = vsel %vm368, %v360, %v370
        %374 = vst [vmem:[#allocation3 + $0x30] sm:$0xff] %v369
        %375 = vst [vmem:[#allocation3 + $0x38] sm:$0xff] %v371
        %v376 = vld [vmem:[#allocation2 + $0x4] sm:$0xff]
        %v377 = vld [vmem:[#allocation2 + $0xc] sm:$0xf]
        %v378 = vld [vmem:[#allocation2 + $0x14] sm:$0xff]
        %v379 = vld [vmem:[#allocation2 + $0x1c] sm:$0xf]
        %384 = vrot.lane.b32.xlu0 %v376, 64
        %v385 = vpop.permute.xlu0 %384
        %386 = vrot.lane.b32.xlu0 %v377, 64
        %v387 = vpop.permute.xlu0 %386
        %388 = vrot.lane.b32.xlu0 %v378, 64
        %v389 = vpop.permute.xlu0 %388
        %390 = vrot.lane.b32.xlu0 %v379, 64
        %v391 = vpop.permute.xlu0 %390
        %v392 = vrot.slane %v385, 4
        %v393 = vrot.slane %v387, 4
        %v394 = vrot.slane %v389, 4
        %v395 = vrot.slane %v391, 4
        %v396 = vsel %vm308, %v392, %v393
        %v397 = vsel %vm368, %v385, %v396
        %v398 = vsel %vm308, %v394, %v395
        %v399 = vsel %vm368, %v389, %v398
        %402 = vst [vmem:[#allocation3 + $0x40] sm:$0xff] %v397
        %403 = vst [vmem:[#allocation3 + $0x48] sm:$0xff] %v399
        %v404 = vld [vmem:[#allocation2] sm:$0xff]
        %v405 = vld [vmem:[#allocation2 + $0x8] sm:$0xf]
        %v406 = vld [vmem:[#allocation2 + $0x10] sm:$0xff]
        %v407 = vld [vmem:[#allocation2 + $0x18] sm:$0xf]
        %412 = vrot.lane.b32.xlu0 %v404, 96
        %v413 = vpop.permute.xlu0 %412
        %414 = vrot.lane.b32.xlu0 %v405, 96
        %v415 = vpop.permute.xlu0 %414
        %416 = vrot.lane.b32.xlu0 %v406, 96
        %v417 = vpop.permute.xlu0 %416
        %418 = vrot.lane.b32.xlu0 %v407, 96
        %v419 = vpop.permute.xlu0 %418
        %v420 = vrot.slane %v413, 4
        %v421 = vrot.slane %v415, 4
        %v422 = vrot.slane %v417, 4
        %v423 = vrot.slane %v419, 4
        %v424 = vsel %vm308, %v420, %v421
        %v425 = vsel %vm339, %v413, %v424
        %v426 = vsel %vm308, %v422, %v423
        %v427 = vsel %vm339, %v417, %v426
        %430 = vst [vmem:[#allocation3 + $0x50] sm:$0xff] %v425
        %431 = vst [vmem:[#allocation3 + $0x58] sm:$0xff] %v427
        %v432 = vld [vmem:[#allocation2 + $0x4] sm:$0xff]
        %v433 = vld [vmem:[#allocation2 + $0xc] sm:$0xf]
        %v434 = vld [vmem:[#allocation2 + $0x14] sm:$0xff]
        %v435 = vld [vmem:[#allocation2 + $0x1c] sm:$0xf]
        %440 = vrot.lane.b32.xlu0 %v432, 32
        %v441 = vpop.permute.xlu0 %440
        %442 = vrot.lane.b32.xlu0 %v433, 32
        %v443 = vpop.permute.xlu0 %442
        %444 = vrot.lane.b32.xlu0 %v434, 32
        %v445 = vpop.permute.xlu0 %444
        %446 = vrot.lane.b32.xlu0 %v435, 32
        %v447 = vpop.permute.xlu0 %446
        %v448 = vrot.slane %v441, 4
        %v449 = vrot.slane %v443, 4
        %v450 = vrot.slane %v445, 4
        %v451 = vrot.slane %v447, 4
        %v452 = vsel %vm308, %v448, %v449
        %v453 = vsel %vm310, %v441, %v452
        %v454 = vsel %vm308, %v450, %v451
        %v455 = vsel %vm310, %v445, %v454
        %458 = vst [vmem:[#allocation3 + $0x60] sm:$0xff] %v453
        %459 = vst [vmem:[#allocation3 + $0x68] sm:$0xff] %v455
        %v460 = vld [vmem:[%s1] sm:$0xf]
        %v461 = vld [vmem:[#allocation3] sm:$0xff]
        %v462 = vld [vmem:[#allocation3 + $0x8] sm:$0xff]
        %v463 = vld [vmem:[#allocation3 + $0x10] sm:$0xff]
        %v464 = vld [vmem:[#allocation3 + $0x18] sm:$0xff]
        %v465 = vld [vmem:[#allocation3 + $0x20] sm:$0xff]
        %v466 = vld [vmem:[#allocation3 + $0x28] sm:$0xff]
        %v467 = vld [vmem:[#allocation3 + $0x30] sm:$0xff]
        %v468 = vld [vmem:[#allocation3 + $0x38] sm:$0xff]
        %v469 = vld [vmem:[#allocation3 + $0x40] sm:$0xff]
        %v470 = vld [vmem:[#allocation3 + $0x48] sm:$0xff]
        %v471 = vld [vmem:[#allocation3 + $0x50] sm:$0xff]
        %v472 = vld [vmem:[#allocation3 + $0x58] sm:$0xff]
        %v473 = vld [vmem:[#allocation3 + $0x60] sm:$0xff]
        %v474 = vld [vmem:[#allocation3 + $0x68] sm:$0xff]
        %v475 = vld [vmem:[%s247] sm:$0xff]
        %477 = vset.pattern.permute.xlu0 0
        %478 = vperm.xlu0 %477, %v475
        %v479 = vpop.permute.xlu0 %478
        %v495 = vunpack.c.l.b16 %v461
        %v496 = vunpack.c.h.b16 %v461
        %v497 = vunpack.c.l.b16 %v462
        %v498 = vunpack.c.h.b16 %v462
        %v499 = vunpack.c.l.b16 %v463
        %v500 = vunpack.c.h.b16 %v463
        %v501 = vunpack.c.l.b16 %v464
        %v502 = vunpack.c.h.b16 %v464
        %v503 = vunpack.c.l.b16 %v465
        %v504 = vunpack.c.h.b16 %v465
        %v505 = vunpack.c.l.b16 %v466
        %v506 = vunpack.c.h.b16 %v466
        %v507 = vunpack.c.l.b16 %v467
        %v508 = vunpack.c.h.b16 %v467
        %v509 = vunpack.c.l.b16 %v468
        %v510 = vunpack.c.h.b16 %v468
        %v511 = vunpack.c.l.b16 %v469
        %v512 = vunpack.c.h.b16 %v469
        %v513 = vunpack.c.l.b16 %v470
        %v514 = vunpack.c.h.b16 %v470
        %v515 = vunpack.c.l.b16 %v471
        %v516 = vunpack.c.h.b16 %v471
        %v517 = vunpack.c.l.b16 %v472
        %v518 = vunpack.c.h.b16 %v472
        %v519 = vunpack.c.l.b16 %v473
        %v520 = vunpack.c.h.b16 %v473
        %v521 = vunpack.c.l.b16 %v474
        %v522 = vunpack.c.h.b16 %v474
        %v523 = vpack.c.b16 %v497, %v495
        %v524 = vpack.c.b16 %v498, %v496
        %v525 = vpack.c.b16 %v501, %v499
        %v526 = vpack.c.b16 %v502, %v500
        %v527 = vpack.c.b16 %v505, %v503
        %v528 = vpack.c.b16 %v506, %v504
        %v529 = vpack.c.b16 %v509, %v507
        %v530 = vpack.c.b16 %v510, %v508
        %v531 = vpack.c.b16 %v513, %v511
        %v532 = vpack.c.b16 %v514, %v512
        %v533 = vpack.c.b16 %v517, %v515
        %v534 = vpack.c.b16 %v518, %v516
        %v535 = vpack.c.b16 %v521, %v519
        %v536 = vpack.c.b16 %v522, %v520
        %vm551 = vcmask 916480
        %v553 = vsel %vm551, %v460, 0
        %555 = vmatprep.subr.bf16.mxu0 0
        %556 = vmatpush1.bf16.msra.mxu0 0
        %557 = vmatprep.subr.bf16.mxu0 %v536
        %558 = vmatpush1.bf16.msra.mxu0 %v535
        %559 = vmatprep.subr.bf16.mxu0 %v534
        %560 = vmatpush1.bf16.msra.mxu0 %v533
        %561 = vmatprep.subr.bf16.mxu0 %v532
        %562 = vmatpush1.bf16.msra.mxu0 %v531
        %563 = vmatprep.subr.bf16.mxu0 %v530
        %564 = vmatpush1.bf16.msra.mxu0 %v529
        %565 = vmatprep.subr.bf16.mxu0 %v528
        %566 = vmatpush1.bf16.msra.mxu0 %v527
        %567 = vmatprep.subr.bf16.mxu0 %v526
        %568 = vmatpush1.bf16.msra.mxu0 %v525
        %569 = vmatprep.subr.bf16.mxu0 %v524
        %570 = vmatpush1.bf16.msra.mxu0 %v523
        %571 = vmatprep.subr.bf16.mxu0 0
        %572 = vmatpush2.bf16.msra.mxu0 0
        %573 = vmatprep.subr.bf16.mxu0 0
        %574 = vmatpush2.bf16.msra.mxu0 0
        %575 = vmatprep.subr.bf16.mxu0 0
        %576 = vmatpush2.bf16.msra.mxu0 0
        %577 = vmatprep.subr.bf16.mxu0 0
        %578 = vmatpush2.bf16.msra.mxu0 0
        %579 = vmatprep.subr.bf16.mxu0 0
        %580 = vmatpush2.bf16.msra.mxu0 0
        %581 = vmatprep.subr.bf16.mxu0 0
        %582 = vmatpush2.bf16.msra.mxu0 0
        %583 = vmatprep.subr.bf16.mxu0 0
        %584 = vmatpush2.bf16.msra.mxu0 0
        %585 = vmatprep.subr.bf16.mxu0 0
        %586 = vmatpush2.bf16.msra.mxu0 0
        %587 = vmatprep.mubr.bf16.mxu0 0
        %588 = vmatmul.mubr.bf16.gmra.mxu0 %v553
        %v589 = vpop.f32.mrf.mxu0
        %v590 = vadd.f32 %v479, %v589
        %v591 = vpop.f32.mrf.mxu0
        %v592 = vadd.f32 %v479, %v591
        %v593 = vpop.f32.mrf.mxu0
        %v594 = vpop.f32.mrf.mxu0
        %595 = vdwg.mxu0
        %596 = vst [vmem:[%s243] sm:$0xff] %v590
        %597 = vst [vmem:[%s243 + $0x8] sm:$0xff] %v592
        %v598 = vld [vmem:[#allocation2] sm:$0xff]
        %v599 = vld [vmem:[#allocation2 + $0x8] sm:$0xf]
        %v600 = vld [vmem:[#allocation2 + $0x10] sm:$0xff]
        %v601 = vld [vmem:[#allocation2 + $0x18] sm:$0xf]
        %606 = vrot.lane.b32.xlu0 %v598, 34
        %v607 = vpop.permute.xlu0 %606
        %608 = vrot.lane.b32.xlu0 %v599, 34
        %v609 = vpop.permute.xlu0 %608
        %610 = vrot.lane.b32.xlu0 %v600, 34
        %v611 = vpop.permute.xlu0 %610
        %612 = vrot.lane.b32.xlu0 %v601, 34
        %v613 = vpop.permute.xlu0 %612
        %v614 = vrot.slane %v607, 4
        %v615 = vrot.slane %v609, 4
        %v616 = vrot.slane %v611, 4
        %v617 = vrot.slane %v613, 4
        %v618 = vsel %vm308, %v614, %v615
        %vm619 = vcmask 277504
        %v620 = vsel %vm619, %v607, %v618
        %v621 = vsel %vm308, %v616, %v617
        %v622 = vsel %vm619, %v611, %v621
        %625 = vst [vmem:[#allocation3] sm:$0xff] %v620
        %626 = vst [vmem:[#allocation3 + $0x8] sm:$0xff] %v622
        %v627 = vld [vmem:[#allocation2] sm:$0xff]
        %v628 = vld [vmem:[#allocation2 + $0x8] sm:$0xf]
        %v629 = vld [vmem:[#allocation2 + $0x10] sm:$0xff]
        %v630 = vld [vmem:[#allocation2 + $0x18] sm:$0xf]
        %635 = vrot.lane.b32.xlu0 %v627, 2
        %v636 = vpop.permute.xlu0 %635
        %637 = vrot.lane.b32.xlu0 %v628, 2
        %v638 = vpop.permute.xlu0 %637
        %639 = vrot.lane.b32.xlu0 %v629, 2
        %v640 = vpop.permute.xlu0 %639
        %641 = vrot.lane.b32.xlu0 %v630, 2
        %v642 = vpop.permute.xlu0 %641
        %v643 = vrot.slane %v636, 4
        %v644 = vrot.slane %v638, 4
        %v645 = vrot.slane %v640, 4
        %v646 = vrot.slane %v642, 4
        %v647 = vsel %vm308, %v643, %v644
        %vm648 = vcmask 15360
        %v649 = vsel %vm648, %v636, %v647
        %v650 = vsel %vm308, %v645, %v646
        %v651 = vsel %vm648, %v640, %v650
        %654 = vst [vmem:[#allocation3 + $0x10] sm:$0xff] %v649
        %655 = vst [vmem:[#allocation3 + $0x18] sm:$0xff] %v651
        %v656 = vld [vmem:[#allocation2 + $0x4] sm:$0xff]
        %v657 = vld [vmem:[#allocation2 + $0xc] sm:$0xf]
        %v658 = vld [vmem:[#allocation2 + $0x14] sm:$0xff]
        %v659 = vld [vmem:[#allocation2 + $0x1c] sm:$0xf]
        %664 = vrot.lane.b32.xlu0 %v656, 98
        %v665 = vpop.permute.xlu0 %664
        %666 = vrot.lane.b32.xlu0 %v657, 98
        %v667 = vpop.permute.xlu0 %666
        %668 = vrot.lane.b32.xlu0 %v658, 98
        %v669 = vpop.permute.xlu0 %668
        %670 = vrot.lane.b32.xlu0 %v659, 98
        %v671 = vpop.permute.xlu0 %670
        %v672 = vrot.slane %v665, 4
        %v673 = vrot.slane %v667, 4
        %v674 = vrot.slane %v669, 4
        %v675 = vrot.slane %v671, 4
        %v676 = vsel %vm308, %v672, %v673
        %vm677 = vcmask 801792
        %v678 = vsel %vm677, %v665, %v676
        %v679 = vsel %vm308, %v674, %v675
        %v680 = vsel %vm677, %v669, %v679
        %683 = vst [vmem:[#allocation3 + $0x20] sm:$0xff] %v678
        %684 = vst [vmem:[#allocation3 + $0x28] sm:$0xff] %v680
        %v685 = vld [vmem:[#allocation7] sm:$0xf]
        %v686 = vld [vmem:[#allocation3] sm:$0xff]
        %v687 = vld [vmem:[#allocation3 + $0x8] sm:$0xff]
        %v688 = vld [vmem:[#allocation3 + $0x10] sm:$0xff]
        %v689 = vld [vmem:[#allocation3 + $0x18] sm:$0xff]
        %v690 = vld [vmem:[#allocation3 + $0x20] sm:$0xff]
        %v691 = vld [vmem:[#allocation3 + $0x28] sm:$0xff]
        %v698 = vunpack.c.l.b16 %v686
        %v699 = vunpack.c.h.b16 %v686
        %v700 = vunpack.c.l.b16 %v687
        %v701 = vunpack.c.h.b16 %v687
        %v702 = vunpack.c.l.b16 %v688
        %v703 = vunpack.c.h.b16 %v688
        %v704 = vunpack.c.l.b16 %v689
        %v705 = vunpack.c.h.b16 %v689
        %v706 = vunpack.c.l.b16 %v690
        %v707 = vunpack.c.h.b16 %v690
        %v708 = vunpack.c.l.b16 %v691
        %v709 = vunpack.c.h.b16 %v691
        %v710 = vpack.c.b16 %v700, %v698
        %v711 = vpack.c.b16 %v701, %v699
        %v712 = vpack.c.b16 %v704, %v702
        %v713 = vpack.c.b16 %v705, %v703
        %v714 = vpack.c.b16 %v708, %v706
        %v715 = vpack.c.b16 %v709, %v707
        %vm722 = vcmask 392192
        %v724 = vsel %vm722, %v685, 0
        %726 = vmatprep.subr.bf16.mxu0 0
        %727 = vmatpush1.bf16.msra.mxu0 0
        %728 = vmatprep.subr.bf16.mxu0 0
        %729 = vmatpush1.bf16.msra.mxu0 0
        %730 = vmatprep.subr.bf16.mxu0 0
        %731 = vmatpush1.bf16.msra.mxu0 0
        %732 = vmatprep.subr.bf16.mxu0 0
        %733 = vmatpush1.bf16.msra.mxu0 0
        %734 = vmatprep.subr.bf16.mxu0 0
        %735 = vmatpush1.bf16.msra.mxu0 0
        %736 = vmatprep.subr.bf16.mxu0 %v715
        %737 = vmatpush1.bf16.msra.mxu0 %v714
        %738 = vmatprep.subr.bf16.mxu0 %v713
        %739 = vmatpush1.bf16.msra.mxu0 %v712
        %740 = vmatprep.subr.bf16.mxu0 %v711
        %741 = vmatpush1.bf16.msra.mxu0 %v710
        %742 = vmatprep.subr.bf16.mxu0 0
        %743 = vmatpush2.bf16.msra.mxu0 0
        %744 = vmatprep.subr.bf16.mxu0 0
        %745 = vmatpush2.bf16.msra.mxu0 0
        %746 = vmatprep.subr.bf16.mxu0 0
        %747 = vmatpush2.bf16.msra.mxu0 0
        %748 = vmatprep.subr.bf16.mxu0 0
        %749 = vmatpush2.bf16.msra.mxu0 0
        %750 = vmatprep.subr.bf16.mxu0 0
        %751 = vmatpush2.bf16.msra.mxu0 0
        %752 = vmatprep.subr.bf16.mxu0 0
        %753 = vmatpush2.bf16.msra.mxu0 0
        %754 = vmatprep.subr.bf16.mxu0 0
        %755 = vmatpush2.bf16.msra.mxu0 0
        %756 = vmatprep.subr.bf16.mxu0 0
        %757 = vmatpush2.bf16.msra.mxu0 0
        %758 = vmatprep.mubr.bf16.mxu0 0
        %759 = vmatmul.mubr.bf16.gmra.mxu0 %v724
        %v760 = vpop.f32.mrf.mxu0
        %v761 = vadd.f32 0.0, %v760
        %v762 = vpop.f32.mrf.mxu0
        %v763 = vadd.f32 0.0, %v762
        %v764 = vpop.f32.mrf.mxu0
        %v765 = vpop.f32.mrf.mxu0
        %766 = vdwg.mxu0
        %vm767 = vcmp.ge.s32.totalorder %v282, 2
        %vm768 = vcmp.ge.s32.totalorder %v283, 2
        %v769 = vld [vmem:[%s243] sm:$0xff]
        %v770 = vld [vmem:[%s243 + $0x8] sm:$0xff]
        %v771 = vsel %vm767, 1, 0
        %v772 = vsel %vm768, 1, 0
        %vm773 = vcmp.eq.s32.totalorder %v771, 1
        %vm774 = vcmp.eq.s32.totalorder %v772, 1
        %v775 = vsel %vm773, %v761, 0.0
        %v776 = vsel %vm774, %v763, 0.0
        %v777 = vadd.f32 %v769, %v775
        %v778 = vadd.f32 %v770, %v776
        %779 = vst [vmem:[%s243] sm:$0xff] %v777
        %780 = vst [vmem:[%s243 + $0x8] sm:$0xff] %v778
        %v781 = vld [vmem:[#allocation2] sm:$0xff]
        %v782 = vld [vmem:[#allocation2 + $0x8] sm:$0xf]
        %v783 = vld [vmem:[#allocation2 + $0x10] sm:$0xff]
        %v784 = vld [vmem:[#allocation2 + $0x18] sm:$0xf]
        %789 = vrot.lane.b32.xlu0 %v781, 30
        %v790 = vpop.permute.xlu0 %789
        %791 = vrot.lane.b32.xlu0 %v782, 30
        %v792 = vpop.permute.xlu0 %791
        %793 = vrot.lane.b32.xlu0 %v783, 30
        %v794 = vpop.permute.xlu0 %793
        %795 = vrot.lane.b32.xlu0 %v784, 30
        %v796 = vpop.permute.xlu0 %795
        %v797 = vrot.slane %v790, 4
        %v798 = vrot.slane %v792, 4
        %v799 = vrot.slane %v794, 4
        %v800 = vrot.slane %v796, 4
        %v801 = vsel %vm308, %v797, %v798
        %vm802 = vcmask 244736
        %v803 = vsel %vm802, %v790, %v801
        %v804 = vsel %vm308, %v799, %v800
        %v805 = vsel %vm802, %v794, %v804
        %808 = vst [vmem:[#allocation3] sm:$0xff] %v803
        %809 = vst [vmem:[#allocation3 + $0x8] sm:$0xff] %v805
        %v810 = vld [vmem:[#allocation2 + $0x4] sm:$0xff]
        %v811 = vld [vmem:[#allocation2 + $0xc] sm:$0xf]
        %v812 = vld [vmem:[#allocation2 + $0x14] sm:$0xff]
        %v813 = vld [vmem:[#allocation2 + $0x1c] sm:$0xf]
        %818 = vrot.lane.b32.xlu0 %v810, 126
        %v819 = vpop.permute.xlu0 %818
        %820 = vrot.lane.b32.xlu0 %v811, 126
        %v821 = vpop.permute.xlu0 %820
        %822 = vrot.lane.b32.xlu0 %v812, 126
        %v823 = vpop.permute.xlu0 %822
        %824 = vrot.lane.b32.xlu0 %v813, 126
        %v825 = vpop.permute.xlu0 %824
        %v826 = vrot.slane %v819, 4
        %v827 = vrot.slane %v821, 4
        %v828 = vrot.slane %v823, 4
        %v829 = vrot.slane %v825, 4
        %v830 = vsel %vm308, %v826, %v827
        %vm831 = vcmask 1031168
        %v832 = vsel %vm831, %v819, %v830
        %v833 = vsel %vm308, %v828, %v829
        %v834 = vsel %vm831, %v823, %v833
        %837 = vst [vmem:[#allocation3 + $0x10] sm:$0xff] %v832
        %838 = vst [vmem:[#allocation3 + $0x18] sm:$0xff] %v834
        %v839 = vld [vmem:[#allocation2 + $0x4] sm:$0xff]
        %v840 = vld [vmem:[#allocation2 + $0xc] sm:$0xf]
        %v841 = vld [vmem:[#allocation2 + $0x14] sm:$0xff]
        %v842 = vld [vmem:[#allocation2 + $0x1c] sm:$0xf]
        %847 = vrot.lane.b32.xlu0 %v839, 94
        %v848 = vpop.permute.xlu0 %847
        %849 = vrot.lane.b32.xlu0 %v840, 94
        %v850 = vpop.permute.xlu0 %849
        %851 = vrot.lane.b32.xlu0 %v841, 94
        %v852 = vpop.permute.xlu0 %851
        %853 = vrot.lane.b32.xlu0 %v842, 94
        %v854 = vpop.permute.xlu0 %853
        %v855 = vrot.slane %v848, 4
        %v856 = vrot.slane %v850, 4
        %v857 = vrot.slane %v852, 4
        %v858 = vrot.slane %v854, 4
        %v859 = vsel %vm308, %v855, %v856
        %vm860 = vcmask 769024
        %v861 = vsel %vm860, %v848, %v859
        %v862 = vsel %vm308, %v857, %v858
        %v863 = vsel %vm860, %v852, %v862
        %866 = vst [vmem:[#allocation3 + $0x20] sm:$0xff] %v861
        %867 = vst [vmem:[#allocation3 + $0x28] sm:$0xff] %v863
        %s868 = scalar_lea.vmem [#allocation7], 4
        %v869 = vld [vmem:[%s868] sm:$0xf]
        %v870 = vld [vmem:[#allocation3] sm:$0xff]
        %v871 = vld [vmem:[#allocation3 + $0x8] sm:$0xff]
        %v872 = vld [vmem:[#allocation3 + $0x10] sm:$0xff]
        %v873 = vld [vmem:[#allocation3 + $0x18] sm:$0xff]
        %v874 = vld [vmem:[#allocation3 + $0x20] sm:$0xff]
        %v875 = vld [vmem:[#allocation3 + $0x28] sm:$0xff]
        %v882 = vunpack.c.l.b16 %v870
        %v883 = vunpack.c.h.b16 %v870
        %v884 = vunpack.c.l.b16 %v871
        %v885 = vunpack.c.h.b16 %v871
        %v886 = vunpack.c.l.b16 %v872
        %v887 = vunpack.c.h.b16 %v872
        %v888 = vunpack.c.l.b16 %v873
        %v889 = vunpack.c.h.b16 %v873
        %v890 = vunpack.c.l.b16 %v874
        %v891 = vunpack.c.h.b16 %v874
        %v892 = vunpack.c.l.b16 %v875
        %v893 = vunpack.c.h.b16 %v875
        %v894 = vpack.c.b16 %v884, %v882
        %v895 = vpack.c.b16 %v885, %v883
        %v896 = vpack.c.b16 %v888, %v886
        %v897 = vpack.c.b16 %v889, %v887
        %v898 = vpack.c.b16 %v892, %v890
        %v899 = vpack.c.b16 %v893, %v891
        %v907 = vsel %vm722, %v869, 0
        %909 = vmatprep.subr.bf16.mxu0 0
        %910 = vmatpush1.bf16.msra.mxu0 0
        %911 = vmatprep.subr.bf16.mxu0 0
        %912 = vmatpush1.bf16.msra.mxu0 0
        %913 = vmatprep.subr.bf16.mxu0 0
        %914 = vmatpush1.bf16.msra.mxu0 0
        %915 = vmatprep.subr.bf16.mxu0 0
        %916 = vmatpush1.bf16.msra.mxu0 0
        %917 = vmatprep.subr.bf16.mxu0 0
        %918 = vmatpush1.bf16.msra.mxu0 0
        %919 = vmatprep.subr.bf16.mxu0 %v899
        %920 = vmatpush1.bf16.msra.mxu0 %v898
        %921 = vmatprep.subr.bf16.mxu0 %v897
        %922 = vmatpush1.bf16.msra.mxu0 %v896
        %923 = vmatprep.subr.bf16.mxu0 %v895
        %924 = vmatpush1.bf16.msra.mxu0 %v894
        %925 = vmatprep.subr.bf16.mxu0 0
        %926 = vmatpush2.bf16.msra.mxu0 0
        %927 = vmatprep.subr.bf16.mxu0 0
        %928 = vmatpush2.bf16.msra.mxu0 0
        %929 = vmatprep.subr.bf16.mxu0 0
        %930 = vmatpush2.bf16.msra.mxu0 0
        %931 = vmatprep.subr.bf16.mxu0 0
        %932 = vmatpush2.bf16.msra.mxu0 0
        %933 = vmatprep.subr.bf16.mxu0 0
        %934 = vmatpush2.bf16.msra.mxu0 0
        %935 = vmatprep.subr.bf16.mxu0 0
        %936 = vmatpush2.bf16.msra.mxu0 0
        %937 = vmatprep.subr.bf16.mxu0 0
        %938 = vmatpush2.bf16.msra.mxu0 0
        %939 = vmatprep.subr.bf16.mxu0 0
        %940 = vmatpush2.bf16.msra.mxu0 0
        %941 = vmatprep.mubr.bf16.mxu0 0
        %942 = vmatmul.mubr.bf16.gmra.mxu0 %v907
        %v943 = vpop.f32.mrf.mxu0
        %v944 = vadd.f32 0.0, %v943
        %v945 = vpop.f32.mrf.mxu0
        %v946 = vadd.f32 0.0, %v945
        %v947 = vpop.f32.mrf.mxu0
        %v948 = vpop.f32.mrf.mxu0
        %949 = vdwg.mxu0
        %vm950 = vcmp.lt.s32.totalorder %v282, 14
        %vm951 = vcmp.lt.s32.totalorder %v283, 14
        %v952 = vld [vmem:[%s243] sm:$0xff]
        %v953 = vld [vmem:[%s243 + $0x8] sm:$0xff]
        %v954 = vsel %vm950, 1, 0
        %v955 = vsel %vm951, 1, 0
        %vm956 = vcmp.eq.s32.totalorder %v954, 1
        %vm957 = vcmp.eq.s32.totalorder %v955, 1
        %v958 = vsel %vm956, %v944, 0.0
        %v959 = vsel %vm957, %v946, 0.0
        %v960 = vadd.f32 %v952, %v958
        %v961 = vadd.f32 %v953, %v959
        %962 = vst [vmem:[%s243] sm:$0xff] %v960
        %963 = vst [vmem:[%s243 + $0x8] sm:$0xff] %v961
        %v964 = vld [vmem:[#allocation2] sm:$0xff]
        %v965 = vld [vmem:[#allocation2 + $0x8] sm:$0xf]
        %v966 = vld [vmem:[#allocation2 + $0x10] sm:$0xff]
        %v967 = vld [vmem:[#allocation2 + $0x18] sm:$0xf]
        %972 = vrot.lane.b32.xlu0 %v964, 68
        %v973 = vpop.permute.xlu0 %972
        %974 = vrot.lane.b32.xlu0 %v965, 68
        %v975 = vpop.permute.xlu0 %974
        %976 = vrot.lane.b32.xlu0 %v966, 68
        %v977 = vpop.permute.xlu0 %976
        %978 = vrot.lane.b32.xlu0 %v967, 68
        %v979 = vpop.permute.xlu0 %978
        %v980 = vrot.slane %v973, 4
        %v981 = vrot.slane %v975, 4
        %v982 = vrot.slane %v977, 4
        %v983 = vrot.slane %v979, 4
        %v984 = vsel %vm308, %v980, %v981
        %vm985 = vcmask 556032
        %v986 = vsel %vm985, %v973, %v984
        %v987 = vsel %vm308, %v982, %v983
        %v988 = vsel %vm985, %v977, %v987
        %991 = vst [vmem:[#allocation3] sm:$0xff] %v986
        %992 = vst [vmem:[#allocation3 + $0x8] sm:$0xff] %v988
        %v993 = vld [vmem:[#allocation2] sm:$0xff]
        %v994 = vld [vmem:[#allocation2 + $0x8] sm:$0xf]
        %v995 = vld [vmem:[#allocation2 + $0x10] sm:$0xff]
        %v996 = vld [vmem:[#allocation2 + $0x18] sm:$0xf]
        %1001 = vrot.lane.b32.xlu0 %v993, 4
        %v1002 = vpop.permute.xlu0 %1001
        %1003 = vrot.lane.b32.xlu0 %v994, 4
        %v1004 = vpop.permute.xlu0 %1003
        %1005 = vrot.lane.b32.xlu0 %v995, 4
        %v1006 = vpop.permute.xlu0 %1005
        %1007 = vrot.lane.b32.xlu0 %v996, 4
        %v1008 = vpop.permute.xlu0 %1007
        %v1009 = vrot.slane %v1002, 4
        %v1010 = vrot.slane %v1004, 4
        %v1011 = vrot.slane %v1006, 4
        %v1012 = vrot.slane %v1008, 4
        %v1013 = vsel %vm308, %v1009, %v1010
        %vm1014 = vcmask 31744
        %v1015 = vsel %vm1014, %v1002, %v1013
        %v1016 = vsel %vm308, %v1011, %v1012
        %v1017 = vsel %vm1014, %v1006, %v1016
        %1020 = vst [vmem:[#allocation3 + $0x10] sm:$0xff] %v1015
        %1021 = vst [vmem:[#allocation3 + $0x18] sm:$0xff] %v1017
        %v1022 = vld [vmem:[#allocation2 + $0x4] sm:$0xff]
        %v1023 = vld [vmem:[#allocation2 + $0xc] sm:$0xf]
        %v1024 = vld [vmem:[#allocation2 + $0x14] sm:$0xff]
        %v1025 = vld [vmem:[#allocation2 + $0x1c] sm:$0xf]
        %1030 = vrot.lane.b32.xlu0 %v1022, 68
        %v1031 = vpop.permute.xlu0 %1030
        %1032 = vrot.lane.b32.xlu0 %v1023, 68
        %v1033 = vpop.permute.xlu0 %1032
        %1034 = vrot.lane.b32.xlu0 %v1024, 68
        %v1035 = vpop.permute.xlu0 %1034
        %1036 = vrot.lane.b32.xlu0 %v1025, 68
        %v1037 = vpop.permute.xlu0 %1036
        %v1038 = vrot.slane %v1031, 4
        %v1039 = vrot.slane %v1033, 4
        %v1040 = vrot.slane %v1035, 4
        %v1041 = vrot.slane %v1037, 4
        %v1042 = vsel %vm308, %v1038, %v1039
        %v1043 = vsel %vm985, %v1031, %v1042
        %v1044 = vsel %vm308, %v1040, %v1041
        %v1045 = vsel %vm985, %v1035, %v1044
        %1048 = vst [vmem:[#allocation3 + $0x20] sm:$0xff] %v1043
        %1049 = vst [vmem:[#allocation3 + $0x28] sm:$0xff] %v1045
        %s1050 = scalar_lea.vmem [#allocation7], 8
        %v1051 = vld [vmem:[%s1050] sm:$0xf]
        %v1052 = vld [vmem:[#allocation3] sm:$0xff]
        %v1053 = vld [vmem:[#allocation3 + $0x8] sm:$0xff]
        %v1054 = vld [vmem:[#allocation3 + $0x10] sm:$0xff]
        %v1055 = vld [vmem:[#allocation3 + $0x18] sm:$0xff]
        %v1056 = vld [vmem:[#allocation3 + $0x20] sm:$0xff]
        %v1057 = vld [vmem:[#allocation3 + $0x28] sm:$0xff]
        %v1064 = vunpack.c.l.b16 %v1052
        %v1065 = vunpack.c.h.b16 %v1052
        %v1066 = vunpack.c.l.b16 %v1053
        %v1067 = vunpack.c.h.b16 %v1053
        %v1068 = vunpack.c.l.b16 %v1054
        %v1069 = vunpack.c.h.b16 %v1054
        %v1070 = vunpack.c.l.b16 %v1055
        %v1071 = vunpack.c.h.b16 %v1055
        %v1072 = vunpack.c.l.b16 %v1056
        %v1073 = vunpack.c.h.b16 %v1056
        %v1074 = vunpack.c.l.b16 %v1057
        %v1075 = vunpack.c.h.b16 %v1057
        %v1076 = vpack.c.b16 %v1066, %v1064
        %v1077 = vpack.c.b16 %v1067, %v1065
        %v1078 = vpack.c.b16 %v1070, %v1068
        %v1079 = vpack.c.b16 %v1071, %v1069
        %v1080 = vpack.c.b16 %v1074, %v1072
        %v1081 = vpack.c.b16 %v1075, %v1073
        %v1089 = vsel %vm722, %v1051, 0
        %1091 = vmatprep.subr.bf16.mxu0 0
        %1092 = vmatpush1.bf16.msra.mxu0 0
        %1093 = vmatprep.subr.bf16.mxu0 0
        %1094 = vmatpush1.bf16.msra.mxu0 0
        %1095 = vmatprep.subr.bf16.mxu0 0
        %1096 = vmatpush1.bf16.msra.mxu0 0
        %1097 = vmatprep.subr.bf16.mxu0 0
        %1098 = vmatpush1.bf16.msra.mxu0 0
        %1099 = vmatprep.subr.bf16.mxu0 0
        %1100 = vmatpush1.bf16.msra.mxu0 0
        %1101 = vmatprep.subr.bf16.mxu0 %v1081
        %1102 = vmatpush1.bf16.msra.mxu0 %v1080
        %1103 = vmatprep.subr.bf16.mxu0 %v1079
        %1104 = vmatpush1.bf16.msra.mxu0 %v1078
        %1105 = vmatprep.subr.bf16.mxu0 %v1077
        %1106 = vmatpush1.bf16.msra.mxu0 %v1076
        %1107 = vmatprep.subr.bf16.mxu0 0
        %1108 = vmatpush2.bf16.msra.mxu0 0
        %1109 = vmatprep.subr.bf16.mxu0 0
        %1110 = vmatpush2.bf16.msra.mxu0 0
        %1111 = vmatprep.subr.bf16.mxu0 0
        %1112 = vmatpush2.bf16.msra.mxu0 0
        %1113 = vmatprep.subr.bf16.mxu0 0
        %1114 = vmatpush2.bf16.msra.mxu0 0
        %1115 = vmatprep.subr.bf16.mxu0 0
        %1116 = vmatpush2.bf16.msra.mxu0 0
        %1117 = vmatprep.subr.bf16.mxu0 0
        %1118 = vmatpush2.bf16.msra.mxu0 0
        %1119 = vmatprep.subr.bf16.mxu0 0
        %1120 = vmatpush2.bf16.msra.mxu0 0
        %1121 = vmatprep.subr.bf16.mxu0 0
        %1122 = vmatpush2.bf16.msra.mxu0 0
        %1123 = vmatprep.mubr.bf16.mxu0 0
        %1124 = vmatmul.mubr.bf16.gmra.mxu0 %v1089
        %v1125 = vpop.f32.mrf.mxu0
        %v1126 = vadd.f32 0.0, %v1125
        %v1127 = vpop.f32.mrf.mxu0
        %v1128 = vadd.f32 0.0, %v1127
        %v1129 = vpop.f32.mrf.mxu0
        %v1130 = vpop.f32.mrf.mxu0
        %1131 = vdwg.mxu0
        %vm1132 = vcmp.ge.s32.totalorder %v282, 4
        %vm1133 = vcmp.ge.s32.totalorder %v283, 4
        %v1134 = vld [vmem:[%s243] sm:$0xff]
        %v1135 = vld [vmem:[%s243 + $0x8] sm:$0xff]
        %v1136 = vsel %vm1132, 1, 0
        %v1137 = vsel %vm1133, 1, 0
        %vm1138 = vcmp.eq.s32.totalorder %v1136, 1
        %vm1139 = vcmp.eq.s32.totalorder %v1137, 1
        %v1140 = vsel %vm1138, %v1126, 0.0
        %v1141 = vsel %vm1139, %v1128, 0.0
        %v1142 = vadd.f32 %v1134, %v1140
        %v1143 = vadd.f32 %v1135, %v1141
        %1144 = vst [vmem:[%s243] sm:$0xff] %v1142
        %1145 = vst [vmem:[%s243 + $0x8] sm:$0xff] %v1143
        %v1146 = vld [vmem:[#allocation2] sm:$0xff]
        %v1147 = vld [vmem:[#allocation2 + $0x8] sm:$0xf]
        %v1148 = vld [vmem:[#allocation2 + $0x10] sm:$0xff]
        %v1149 = vld [vmem:[#allocation2 + $0x18] sm:$0xf]
        %1154 = vrot.lane.b32.xlu0 %v1146, 60
        %v1155 = vpop.permute.xlu0 %1154
        %1156 = vrot.lane.b32.xlu0 %v1147, 60
        %v1157 = vpop.permute.xlu0 %1156
        %1158 = vrot.lane.b32.xlu0 %v1148, 60
        %v1159 = vpop.permute.xlu0 %1158
        %1160 = vrot.lane.b32.xlu0 %v1149, 60
        %v1161 = vpop.permute.xlu0 %1160
        %v1162 = vrot.slane %v1155, 4
        %v1163 = vrot.slane %v1157, 4
        %v1164 = vrot.slane %v1159, 4
        %v1165 = vrot.slane %v1161, 4
        %v1166 = vsel %vm308, %v1162, %v1163
        %vm1167 = vcmask 490496
        %v1168 = vsel %vm1167, %v1155, %v1166
        %v1169 = vsel %vm308, %v1164, %v1165
        %v1170 = vsel %vm1167, %v1159, %v1169
        %1173 = vst [vmem:[#allocation3] sm:$0xff] %v1168
        %1174 = vst [vmem:[#allocation3 + $0x8] sm:$0xff] %v1170
        %v1175 = vld [vmem:[#allocation2 + $0x4] sm:$0xff]
        %v1176 = vld [vmem:[#allocation2 + $0xc] sm:$0xf]
        %v1177 = vld [vmem:[#allocation2 + $0x14] sm:$0xff]
        %v1178 = vld [vmem:[#allocation2 + $0x1c] sm:$0xf]
        %1183 = vrot.lane.b32.xlu0 %v1175, 124
        %v1184 = vpop.permute.xlu0 %1183
        %1185 = vrot.lane.b32.xlu0 %v1176, 124
        %v1186 = vpop.permute.xlu0 %1185
        %1187 = vrot.lane.b32.xlu0 %v1177, 124
        %v1188 = vpop.permute.xlu0 %1187
        %1189 = vrot.lane.b32.xlu0 %v1178, 124
        %v1190 = vpop.permute.xlu0 %1189
        %v1191 = vrot.slane %v1184, 4
        %v1192 = vrot.slane %v1186, 4
        %v1193 = vrot.slane %v1188, 4
        %v1194 = vrot.slane %v1190, 4
        %v1195 = vsel %vm308, %v1191, %v1192
        %vm1196 = vcmask 1014784
        %v1197 = vsel %vm1196, %v1184, %v1195
        %v1198 = vsel %vm308, %v1193, %v1194
        %v1199 = vsel %vm1196, %v1188, %v1198
        %1202 = vst [vmem:[#allocation3 + $0x10] sm:$0xff] %v1197
        %1203 = vst [vmem:[#allocation3 + $0x18] sm:$0xff] %v1199
        %v1204 = vld [vmem:[#allocation2 + $0x4] sm:$0xff]
        %v1205 = vld [vmem:[#allocation2 + $0xc] sm:$0xf]
        %v1206 = vld [vmem:[#allocation2 + $0x14] sm:$0xff]
        %v1207 = vld [vmem:[#allocation2 + $0x1c] sm:$0xf]
        %1212 = vrot.lane.b32.xlu0 %v1204, 60
        %v1213 = vpop.permute.xlu0 %1212
        %1214 = vrot.lane.b32.xlu0 %v1205, 60
        %v1215 = vpop.permute.xlu0 %1214
        %1216 = vrot.lane.b32.xlu0 %v1206, 60
        %v1217 = vpop.permute.xlu0 %1216
        %1218 = vrot.lane.b32.xlu0 %v1207, 60
        %v1219 = vpop.permute.xlu0 %1218
        %v1220 = vrot.slane %v1213, 4
        %v1221 = vrot.slane %v1215, 4
        %v1222 = vrot.slane %v1217, 4
        %v1223 = vrot.slane %v1219, 4
        %v1224 = vsel %vm308, %v1220, %v1221
        %v1225 = vsel %vm1167, %v1213, %v1224
        %v1226 = vsel %vm308, %v1222, %v1223
        %v1227 = vsel %vm1167, %v1217, %v1226
        %1230 = vst [vmem:[#allocation3 + $0x20] sm:$0xff] %v1225
        %1231 = vst [vmem:[#allocation3 + $0x28] sm:$0xff] %v1227
        %s1232 = scalar_lea.vmem [#allocation7], 12
        %v1233 = vld [vmem:[%s1232] sm:$0xf]
        %v1234 = vld [vmem:[#allocation3] sm:$0xff]
        %v1235 = vld [vmem:[#allocation3 + $0x8] sm:$0xff]
        %v1236 = vld [vmem:[#allocation3 + $0x10] sm:$0xff]
        %v1237 = vld [vmem:[#allocation3 + $0x18] sm:$0xff]
        %v1238 = vld [vmem:[#allocation3 + $0x20] sm:$0xff]
        %v1239 = vld [vmem:[#allocation3 + $0x28] sm:$0xff]
        %v1246 = vunpack.c.l.b16 %v1234
        %v1247 = vunpack.c.h.b16 %v1234
        %v1248 = vunpack.c.l.b16 %v1235
        %v1249 = vunpack.c.h.b16 %v1235
        %v1250 = vunpack.c.l.b16 %v1236
        %v1251 = vunpack.c.h.b16 %v1236
        %v1252 = vunpack.c.l.b16 %v1237
        %v1253 = vunpack.c.h.b16 %v1237
        %v1254 = vunpack.c.l.b16 %v1238
        %v1255 = vunpack.c.h.b16 %v1238
        %v1256 = vunpack.c.l.b16 %v1239
        %v1257 = vunpack.c.h.b16 %v1239
        %v1258 = vpack.c.b16 %v1248, %v1246
        %v1259 = vpack.c.b16 %v1249, %v1247
        %v1260 = vpack.c.b16 %v1252, %v1250
        %v1261 = vpack.c.b16 %v1253, %v1251
        %v1262 = vpack.c.b16 %v1256, %v1254
        %v1263 = vpack.c.b16 %v1257, %v1255
        %v1271 = vsel %vm722, %v1233, 0
        %1273 = vmatprep.subr.bf16.mxu0 0
        %1274 = vmatpush1.bf16.msra.mxu0 0
        %1275 = vmatprep.subr.bf16.mxu0 0
        %1276 = vmatpush1.bf16.msra.mxu0 0
        %1277 = vmatprep.subr.bf16.mxu0 0
        %1278 = vmatpush1.bf16.msra.mxu0 0
        %1279 = vmatprep.subr.bf16.mxu0 0
        %1280 = vmatpush1.bf16.msra.mxu0 0
        %1281 = vmatprep.subr.bf16.mxu0 0
        %1282 = vmatpush1.bf16.msra.mxu0 0
        %1283 = vmatprep.subr.bf16.mxu0 %v1263
        %1284 = vmatpush1.bf16.msra.mxu0 %v1262
        %1285 = vmatprep.subr.bf16.mxu0 %v1261
        %1286 = vmatpush1.bf16.msra.mxu0 %v1260
        %1287 = vmatprep.subr.bf16.mxu0 %v1259
        %1288 = vmatpush1.bf16.msra.mxu0 %v1258
        %1289 = vmatprep.subr.bf16.mxu0 0
        %1290 = vmatpush2.bf16.msra.mxu0 0
        %1291 = vmatprep.subr.bf16.mxu0 0
        %1292 = vmatpush2.bf16.msra.mxu0 0
        %1293 = vmatprep.subr.bf16.mxu0 0
        %1294 = vmatpush2.bf16.msra.mxu0 0
        %1295 = vmatprep.subr.bf16.mxu0 0
        %1296 = vmatpush2.bf16.msra.mxu0 0
        %1297 = vmatprep.subr.bf16.mxu0 0
        %1298 = vmatpush2.bf16.msra.mxu0 0
        %1299 = vmatprep.subr.bf16.mxu0 0
        %1300 = vmatpush2.bf16.msra.mxu0 0
        %1301 = vmatprep.subr.bf16.mxu0 0
        %1302 = vmatpush2.bf16.msra.mxu0 0
        %1303 = vmatprep.subr.bf16.mxu0 0
        %1304 = vmatpush2.bf16.msra.mxu0 0
        %1305 = vmatprep.mubr.bf16.mxu0 0
        %1306 = vmatmul.mubr.bf16.gmra.mxu0 %v1271
        %v1307 = vpop.f32.mrf.mxu0
        %v1308 = vadd.f32 0.0, %v1307
        %v1309 = vpop.f32.mrf.mxu0
        %v1310 = vadd.f32 0.0, %v1309
        %v1311 = vpop.f32.mrf.mxu0
        %v1312 = vpop.f32.mrf.mxu0
        %1313 = vdwg.mxu0
        %vm1314 = vcmp.lt.s32.totalorder %v282, 12
        %vm1315 = vcmp.lt.s32.totalorder %v283, 12
        %v1316 = vld [vmem:[%s243] sm:$0xff]
        %v1317 = vld [vmem:[%s243 + $0x8] sm:$0xff]
        %v1318 = vsel %vm1314, 1, 0
        %v1319 = vsel %vm1315, 1, 0
        %vm1320 = vcmp.eq.s32.totalorder %v1318, 1
        %vm1321 = vcmp.eq.s32.totalorder %v1319, 1
        %v1322 = vsel %vm1320, %v1308, 0.0
        %v1323 = vsel %vm1321, %v1310, 0.0
        %v1324 = vadd.f32 %v1316, %v1322
        %v1325 = vadd.f32 %v1317, %v1323
        %1326 = vst [vmem:[%s243] sm:$0xff] %v1324
        %1327 = vst [vmem:[%s243 + $0x8] sm:$0xff] %v1325
        %v1328 = vld [vmem:[#allocation2] sm:$0xff]
        %v1329 = vld [vmem:[#allocation2 + $0x8] sm:$0xf]
        %v1330 = vld [vmem:[#allocation2 + $0x10] sm:$0xff]
        %v1331 = vld [vmem:[#allocation2 + $0x18] sm:$0xf]
        %1336 = vrot.lane.b32.xlu0 %v1328, 102
        %v1337 = vpop.permute.xlu0 %1336
        %1338 = vrot.lane.b32.xlu0 %v1329, 102
        %v1339 = vpop.permute.xlu0 %1338
        %1340 = vrot.lane.b32.xlu0 %v1330, 102
        %v1341 = vpop.permute.xlu0 %1340
        %1342 = vrot.lane.b32.xlu0 %v1331, 102
        %v1343 = vpop.permute.xlu0 %1342
        %v1344 = vrot.slane %v1337, 4
        %v1345 = vrot.slane %v1339, 4
        %v1346 = vrot.slane %v1341, 4
        %v1347 = vrot.slane %v1343, 4
        %v1348 = vsel %vm308, %v1344, %v1345
        %vm1349 = vcmask 834560
        %v1350 = vsel %vm1349, %v1337, %v1348
        %v1351 = vsel %vm308, %v1346, %v1347
        %v1352 = vsel %vm1349, %v1341, %v1351
        %1355 = vst [vmem:[#allocation3] sm:$0xff] %v1350
        %1356 = vst [vmem:[#allocation3 + $0x8] sm:$0xff] %v1352
        %v1357 = vld [vmem:[#allocation2] sm:$0xff]
        %v1358 = vld [vmem:[#allocation2 + $0x8] sm:$0xf]
        %v1359 = vld [vmem:[#allocation2 + $0x10] sm:$0xff]
        %v1360 = vld [vmem:[#allocation2 + $0x18] sm:$0xf]
        %1365 = vrot.lane.b32.xlu0 %v1357, 6
        %v1366 = vpop.permute.xlu0 %1365
        %1367 = vrot.lane.b32.xlu0 %v1358, 6
        %v1368 = vpop.permute.xlu0 %1367
        %1369 = vrot.lane.b32.xlu0 %v1359, 6
        %v1370 = vpop.permute.xlu0 %1369
        %1371 = vrot.lane.b32.xlu0 %v1360, 6
        %v1372 = vpop.permute.xlu0 %1371
        %v1373 = vrot.slane %v1366, 4
        %v1374 = vrot.slane %v1368, 4
        %v1375 = vrot.slane %v1370, 4
        %v1376 = vrot.slane %v1372, 4
        %v1377 = vsel %vm308, %v1373, %v1374
        %vm1378 = vcmask 48128
        %v1379 = vsel %vm1378, %v1366, %v1377
        %v1380 = vsel %vm308, %v1375, %v1376
        %v1381 = vsel %vm1378, %v1370, %v1380
        %1384 = vst [vmem:[#allocation3 + $0x10] sm:$0xff] %v1379
        %1385 = vst [vmem:[#allocation3 + $0x18] sm:$0xff] %v1381
        %v1386 = vld [vmem:[#allocation2 + $0x4] sm:$0xff]
        %v1387 = vld [vmem:[#allocation2 + $0xc] sm:$0xf]
        %v1388 = vld [vmem:[#allocation2 + $0x14] sm:$0xff]
        %v1389 = vld [vmem:[#allocation2 + $0x1c] sm:$0xf]
        %1394 = vrot.lane.b32.xlu0 %v1386, 38
        %v1395 = vpop.permute.xlu0 %1394
        %1396 = vrot.lane.b32.xlu0 %v1387, 38
        %v1397 = vpop.permute.xlu0 %1396
        %1398 = vrot.lane.b32.xlu0 %v1388, 38
        %v1399 = vpop.permute.xlu0 %1398
        %1400 = vrot.lane.b32.xlu0 %v1389, 38
        %v1401 = vpop.permute.xlu0 %1400
        %v1402 = vrot.slane %v1395, 4
        %v1403 = vrot.slane %v1397, 4
        %v1404 = vrot.slane %v1399, 4
        %v1405 = vrot.slane %v1401, 4
        %v1406 = vsel %vm308, %v1402, %v1403
        %vm1407 = vcmask 310272
        %v1408 = vsel %vm1407, %v1395, %v1406
        %v1409 = vsel %vm308, %v1404, %v1405
        %v1410 = vsel %vm1407, %v1399, %v1409
        %1413 = vst [vmem:[#allocation3 + $0x20] sm:$0xff] %v1408
        %1414 = vst [vmem:[#allocation3 + $0x28] sm:$0xff] %v1410
        %s1415 = scalar_lea.vmem [#allocation7], 16
        %v1416 = vld [vmem:[%s1415] sm:$0xf]
        %v1417 = vld [vmem:[#allocation3] sm:$0xff]
        %v1418 = vld [vmem:[#allocation3 + $0x8] sm:$0xff]
        %v1419 = vld [vmem:[#allocation3 + $0x10] sm:$0xff]
        %v1420 = vld [vmem:[#allocation3 + $0x18] sm:$0xff]
        %v1421 = vld [vmem:[#allocation3 + $0x20] sm:$0xff]
        %v1422 = vld [vmem:[#allocation3 + $0x28] sm:$0xff]
        %v1429 = vunpack.c.l.b16 %v1417
        %v1430 = vunpack.c.h.b16 %v1417
        %v1431 = vunpack.c.l.b16 %v1418
        %v1432 = vunpack.c.h.b16 %v1418
        %v1433 = vunpack.c.l.b16 %v1419
        %v1434 = vunpack.c.h.b16 %v1419
        %v1435 = vunpack.c.l.b16 %v1420
        %v1436 = vunpack.c.h.b16 %v1420
        %v1437 = vunpack.c.l.b16 %v1421
        %v1438 = vunpack.c.h.b16 %v1421
        %v1439 = vunpack.c.l.b16 %v1422
        %v1440 = vunpack.c.h.b16 %v1422
        %v1441 = vpack.c.b16 %v1431, %v1429
        %v1442 = vpack.c.b16 %v1432, %v1430
        %v1443 = vpack.c.b16 %v1435, %v1433
        %v1444 = vpack.c.b16 %v1436, %v1434
        %v1445 = vpack.c.b16 %v1439, %v1437
        %v1446 = vpack.c.b16 %v1440, %v1438
        %v1454 = vsel %vm722, %v1416, 0
        %1456 = vmatprep.subr.bf16.mxu0 0
        %1457 = vmatpush1.bf16.msra.mxu0 0
        %1458 = vmatprep.subr.bf16.mxu0 0
        %1459 = vmatpush1.bf16.msra.mxu0 0
        %1460 = vmatprep.subr.bf16.mxu0 0
        %1461 = vmatpush1.bf16.msra.mxu0 0
        %1462 = vmatprep.subr.bf16.mxu0 0
        %1463 = vmatpush1.bf16.msra.mxu0 0
        %1464 = vmatprep.subr.bf16.mxu0 0
        %1465 = vmatpush1.bf16.msra.mxu0 0
        %1466 = vmatprep.subr.bf16.mxu0 %v1446
        %1467 = vmatpush1.bf16.msra.mxu0 %v1445
        %1468 = vmatprep.subr.bf16.mxu0 %v1444
        %1469 = vmatpush1.bf16.msra.mxu0 %v1443
        %1470 = vmatprep.subr.bf16.mxu0 %v1442
        %1471 = vmatpush1.bf16.msra.mxu0 %v1441
        %1472 = vmatprep.subr.bf16.mxu0 0
        %1473 = vmatpush2.bf16.msra.mxu0 0
        %1474 = vmatprep.subr.bf16.mxu0 0
        %1475 = vmatpush2.bf16.msra.mxu0 0
        %1476 = vmatprep.subr.bf16.mxu0 0
        %1477 = vmatpush2.bf16.msra.mxu0 0
        %1478 = vmatprep.subr.bf16.mxu0 0
        %1479 = vmatpush2.bf16.msra.mxu0 0
        %1480 = vmatprep.subr.bf16.mxu0 0
        %1481 = vmatpush2.bf16.msra.mxu0 0
        %1482 = vmatprep.subr.bf16.mxu0 0
        %1483 = vmatpush2.bf16.msra.mxu0 0
        %1484 = vmatprep.subr.bf16.mxu0 0
        %1485 = vmatpush2.bf16.msra.mxu0 0
        %1486 = vmatprep.subr.bf16.mxu0 0
        %1487 = vmatpush2.bf16.msra.mxu0 0
        %1488 = vmatprep.mubr.bf16.mxu0 0
        %1489 = vmatmul.mubr.bf16.gmra.mxu0 %v1454
        %v1490 = vpop.f32.mrf.mxu0
        %v1491 = vadd.f32 0.0, %v1490
        %v1492 = vpop.f32.mrf.mxu0
        %v1493 = vadd.f32 0.0, %v1492
        %v1494 = vpop.f32.mrf.mxu0
        %v1495 = vpop.f32.mrf.mxu0
        %1496 = vdwg.mxu0
        %vm1497 = vcmp.ge.s32.totalorder %v282, 6
        %vm1498 = vcmp.ge.s32.totalorder %v283, 6
        %v1499 = vld [vmem:[%s243] sm:$0xff]
        %v1500 = vld [vmem:[%s243 + $0x8] sm:$0xff]
        %v1501 = vsel %vm1497, 1, 0
        %v1502 = vsel %vm1498, 1, 0
        %vm1503 = vcmp.eq.s32.totalorder %v1501, 1
        %vm1504 = vcmp.eq.s32.totalorder %v1502, 1
        %v1505 = vsel %vm1503, %v1491, 0.0
        %v1506 = vsel %vm1504, %v1493, 0.0
        %v1507 = vadd.f32 %v1499, %v1505
        %v1508 = vadd.f32 %v1500, %v1506
        %1509 = vst [vmem:[%s243] sm:$0xff] %v1507
        %1510 = vst [vmem:[%s243 + $0x8] sm:$0xff] %v1508
        %v1511 = vld [vmem:[#allocation2] sm:$0xff]
        %v1512 = vld [vmem:[#allocation2 + $0x8] sm:$0xf]
        %v1513 = vld [vmem:[#allocation2 + $0x10] sm:$0xff]
        %v1514 = vld [vmem:[#allocation2 + $0x18] sm:$0xf]
        %1519 = vrot.lane.b32.xlu0 %v1511, 90
        %v1520 = vpop.permute.xlu0 %1519
        %1521 = vrot.lane.b32.xlu0 %v1512, 90
        %v1522 = vpop.permute.xlu0 %1521
        %1523 = vrot.lane.b32.xlu0 %v1513, 90
        %v1524 = vpop.permute.xlu0 %1523
        %1525 = vrot.lane.b32.xlu0 %v1514, 90
        %v1526 = vpop.permute.xlu0 %1525
        %v1527 = vrot.slane %v1520, 4
        %v1528 = vrot.slane %v1522, 4
        %v1529 = vrot.slane %v1524, 4
        %v1530 = vrot.slane %v1526, 4
        %v1531 = vsel %vm308, %v1527, %v1528
        %vm1532 = vcmask 736256
        %v1533 = vsel %vm1532, %v1520, %v1531
        %v1534 = vsel %vm308, %v1529, %v1530
        %v1535 = vsel %vm1532, %v1524, %v1534
        %1538 = vst [vmem:[#allocation3] sm:$0xff] %v1533
        %1539 = vst [vmem:[#allocation3 + $0x8] sm:$0xff] %v1535
        %v1540 = vld [vmem:[#allocation2 + $0x4] sm:$0xff]
        %v1541 = vld [vmem:[#allocation2 + $0xc] sm:$0xf]
        %v1542 = vld [vmem:[#allocation2 + $0x14] sm:$0xff]
        %v1543 = vld [vmem:[#allocation2 + $0x1c] sm:$0xf]
        %1548 = vrot.lane.b32.xlu0 %v1540, 122
        %v1549 = vpop.permute.xlu0 %1548
        %1550 = vrot.lane.b32.xlu0 %v1541, 122
        %v1551 = vpop.permute.xlu0 %1550
        %1552 = vrot.lane.b32.xlu0 %v1542, 122
        %v1553 = vpop.permute.xlu0 %1552
        %1554 = vrot.lane.b32.xlu0 %v1543, 122
        %v1555 = vpop.permute.xlu0 %1554
        %v1556 = vrot.slane %v1549, 4
        %v1557 = vrot.slane %v1551, 4
        %v1558 = vrot.slane %v1553, 4
        %v1559 = vrot.slane %v1555, 4
        %v1560 = vsel %vm308, %v1556, %v1557
        %vm1561 = vcmask 998400
        %v1562 = vsel %vm1561, %v1549, %v1560
        %v1563 = vsel %vm308, %v1558, %v1559
        %v1564 = vsel %vm1561, %v1553, %v1563
        %1567 = vst [vmem:[#allocation3 + $0x10] sm:$0xff] %v1562
        %1568 = vst [vmem:[#allocation3 + $0x18] sm:$0xff] %v1564
        %v1569 = vld [vmem:[#allocation2 + $0x4] sm:$0xff]
        %v1570 = vld [vmem:[#allocation2 + $0xc] sm:$0xf]
        %v1571 = vld [vmem:[#allocation2 + $0x14] sm:$0xff]
        %v1572 = vld [vmem:[#allocation2 + $0x1c] sm:$0xf]
        %1577 = vrot.lane.b32.xlu0 %v1569, 26
        %v1578 = vpop.permute.xlu0 %1577
        %1579 = vrot.lane.b32.xlu0 %v1570, 26
        %v1580 = vpop.permute.xlu0 %1579
        %1581 = vrot.lane.b32.xlu0 %v1571, 26
        %v1582 = vpop.permute.xlu0 %1581
        %1583 = vrot.lane.b32.xlu0 %v1572, 26
        %v1584 = vpop.permute.xlu0 %1583
        %v1585 = vrot.slane %v1578, 4
        %v1586 = vrot.slane %v1580, 4
        %v1587 = vrot.slane %v1582, 4
        %v1588 = vrot.slane %v1584, 4
        %v1589 = vsel %vm308, %v1585, %v1586
        %vm1590 = vcmask 211968
        %v1591 = vsel %vm1590, %v1578, %v1589
        %v1592 = vsel %vm308, %v1587, %v1588
        %v1593 = vsel %vm1590, %v1582, %v1592
        %1596 = vst [vmem:[#allocation3 + $0x20] sm:$0xff] %v1591
        %1597 = vst [vmem:[#allocation3 + $0x28] sm:$0xff] %v1593
        %s1598 = scalar_lea.vmem [#allocation7], 20
        %v1599 = vld [vmem:[%s1598] sm:$0xf]
        %v1600 = vld [vmem:[#allocation3] sm:$0xff]
        %v1601 = vld [vmem:[#allocation3 + $0x8] sm:$0xff]
        %v1602 = vld [vmem:[#allocation3 + $0x10] sm:$0xff]
        %v1603 = vld [vmem:[#allocation3 + $0x18] sm:$0xff]
        %v1604 = vld [vmem:[#allocation3 + $0x20] sm:$0xff]
        %v1605 = vld [vmem:[#allocation3 + $0x28] sm:$0xff]
        %v1612 = vunpack.c.l.b16 %v1600
        %v1613 = vunpack.c.h.b16 %v1600
        %v1614 = vunpack.c.l.b16 %v1601
        %v1615 = vunpack.c.h.b16 %v1601
        %v1616 = vunpack.c.l.b16 %v1602
        %v1617 = vunpack.c.h.b16 %v1602
        %v1618 = vunpack.c.l.b16 %v1603
        %v1619 = vunpack.c.h.b16 %v1603
        %v1620 = vunpack.c.l.b16 %v1604
        %v1621 = vunpack.c.h.b16 %v1604
        %v1622 = vunpack.c.l.b16 %v1605
        %v1623 = vunpack.c.h.b16 %v1605
        %v1624 = vpack.c.b16 %v1614, %v1612
        %v1625 = vpack.c.b16 %v1615, %v1613
        %v1626 = vpack.c.b16 %v1618, %v1616
        %v1627 = vpack.c.b16 %v1619, %v1617
        %v1628 = vpack.c.b16 %v1622, %v1620
        %v1629 = vpack.c.b16 %v1623, %v1621
        %v1637 = vsel %vm722, %v1599, 0
        %1639 = vmatprep.subr.bf16.mxu0 0
        %1640 = vmatpush1.bf16.msra.mxu0 0
        %1641 = vmatprep.subr.bf16.mxu0 0
        %1642 = vmatpush1.bf16.msra.mxu0 0
        %1643 = vmatprep.subr.bf16.mxu0 0
        %1644 = vmatpush1.bf16.msra.mxu0 0
        %1645 = vmatprep.subr.bf16.mxu0 0
        %1646 = vmatpush1.bf16.msra.mxu0 0
        %1647 = vmatprep.subr.bf16.mxu0 0
        %1648 = vmatpush1.bf16.msra.mxu0 0
        %1649 = vmatprep.subr.bf16.mxu0 %v1629
        %1650 = vmatpush1.bf16.msra.mxu0 %v1628
        %1651 = vmatprep.subr.bf16.mxu0 %v1627
        %1652 = vmatpush1.bf16.msra.mxu0 %v1626
        %1653 = vmatprep.subr.bf16.mxu0 %v1625
        %1654 = vmatpush1.bf16.msra.mxu0 %v1624
        %1655 = vmatprep.subr.bf16.mxu0 0
        %1656 = vmatpush2.bf16.msra.mxu0 0
        %1657 = vmatprep.subr.bf16.mxu0 0
        %1658 = vmatpush2.bf16.msra.mxu0 0
        %1659 = vmatprep.subr.bf16.mxu0 0
        %1660 = vmatpush2.bf16.msra.mxu0 0
        %1661 = vmatprep.subr.bf16.mxu0 0
        %1662 = vmatpush2.bf16.msra.mxu0 0
        %1663 = vmatprep.subr.bf16.mxu0 0
        %1664 = vmatpush2.bf16.msra.mxu0 0
        %1665 = vmatprep.subr.bf16.mxu0 0
        %1666 = vmatpush2.bf16.msra.mxu0 0
        %1667 = vmatprep.subr.bf16.mxu0 0
        %1668 = vmatpush2.bf16.msra.mxu0 0
        %1669 = vmatprep.subr.bf16.mxu0 0
        %1670 = vmatpush2.bf16.msra.mxu0 0
        %1671 = vmatprep.mubr.bf16.mxu0 0
        %1672 = vmatmul.mubr.bf16.gmra.mxu0 %v1637
        %v1673 = vpop.f32.mrf.mxu0
        %v1674 = vadd.f32 0.0, %v1673
        %v1675 = vpop.f32.mrf.mxu0
        %v1676 = vadd.f32 0.0, %v1675
        %v1677 = vpop.f32.mrf.mxu0
        %v1678 = vpop.f32.mrf.mxu0
        %1679 = vdwg.mxu0
        %vm1680 = vcmp.lt.s32.totalorder %v282, 10
        %vm1681 = vcmp.lt.s32.totalorder %v283, 10
        %v1682 = vld [vmem:[%s243] sm:$0xff]
        %v1683 = vld [vmem:[%s243 + $0x8] sm:$0xff]
        %v1684 = vsel %vm1680, 1, 0
        %v1685 = vsel %vm1681, 1, 0
        %vm1686 = vcmp.eq.s32.totalorder %v1684, 1
        %vm1687 = vcmp.eq.s32.totalorder %v1685, 1
        %v1688 = vsel %vm1686, %v1674, 0.0
        %v1689 = vsel %vm1687, %v1676, 0.0
        %v1690 = vadd.f32 %v1682, %v1688
        %v1691 = vadd.f32 %v1683, %v1689
        %1692 = vst [vmem:[%s243] sm:$0xff] %v1690
        %1693 = vst [vmem:[%s243 + $0x8] sm:$0xff] %v1691
        %s1694 = sand.u32 %s124, 1
        %s1695 = scalar_lea.sflag [#allocation6], %s1694
        %s1696 = sand.u32 %s124, 1
        %s1697 = smul.addr %s1696, 16
        %s1698 = scalar_lea.vmem [#allocation9], %s1697
        // Predicated region
        $region45: #{tpu_custom_call.1} parent=35 // pred_check
          %p1699 = pneg %p134
        $region46: #{tpu_custom_call.1} parent=35 // pred_check_branch
          %1701 = sbr.rel (%p1699) target = $region48
        $region47: #{tpu_custom_call.1} parent=35 // pred_region
          %s1703 = ssub.s32 256, 256
          %1704 = vsyncadd %s1695, %s1703
          %s1705 = smul.addr %s22, 2
          %s1706 = smul.addr %s1705, 128
          %s1707 = scalar_lea.hbm %s4, %s1706
          %s1709 = sshll.u32 %s1698, 4
          %s1710 = int_to_ptr.vmem [resolvable:$true] %s1709
          %1712 = dma.vmem_to_hbm [thread:$0]  %s1710, 256, %s1707, %s1695
        $region48: #{tpu_custom_call.1} parent=35 // pred_fallthru
          _
      $region36: #{tpu_custom_call.1} parent=5 // pred_fallthru
        _
      %p1713 = scmp.le.s32.totalorder 2, %s17
      // Predicated region
      $region49: #{tpu_custom_call.1} parent=5 // pred_check
        %p1714 = pneg %p1713
      $region50: #{tpu_custom_call.1} parent=5 // pred_check_branch
        %1716 = sbr.rel (%p1714) target = $region52
      $region51: #{tpu_custom_call.1} parent=5 // pred_region
        %s1717 = ssub.s32 %s17, 2
        // Predicated region
        $region53: #{tpu_custom_call.1} parent=51 // pred_check
          %p1718 = pneg %p140
        $region54: #{tpu_custom_call.1} parent=51 // pred_check_branch
          %1720 = sbr.rel (%p1718) target = $region56
        $region55: #{tpu_custom_call.1} parent=51 // pred_region
          %s1721 = sand.u32 %s125, 1
          %s1722 = scalar_lea.sflag [#allocation6], %s1721
          %s1723 = sand.u32 %s125, 1
          %s1724 = smul.addr %s1723, 16
          %s1725 = scalar_lea.vmem [#allocation9], %s1724
          %1726 = dma.done %s1722, 256
        $region56: #{tpu_custom_call.1} parent=51 // pred_fallthru
          _
      $region52: #{tpu_custom_call.1} parent=5 // pred_fallthru
        _
    $region6: #{tpu_custom_call.1} parent=1 // loop_footer
      %s21 = sadd.s32 1, %s17
    $region7: #{tpu_custom_call.1} parent=1 // loop_footer_branch
      %16 = sbr.rel target = $region3
    $region8: #{tpu_custom_call.1} parent=1 // loop_exit
      _
    %1727 = vsyncpa [#allocation5], 1
    %s1728 = scalar_lea.sflag [#allocation5], 1
    %1729 = vsyncpa %s1728, 1
    %1730 = vsyncpa [#allocation8], 1
    %1731 = vsyncpa [#allocation6], 1
    %s1732 = scalar_lea.sflag [#allocation6], 1
    %1733 = vsyncpa %s1732, 1

</llo_original>
